<compile_context>
chip_gen: v6e
topology: v6e:2x2x1
jax: 0.10.0
libtpu: 0.0.40
codegen_flags: <defaults>
</compile_context>

<pallas_src>
import jax
import jax.numpy as jnp
import numpy as np
from jax import lax
from jax.experimental import pallas as pl
from jax.experimental.pallas import tpu as pltpu


def _make_gru_kernel(T, B, H, num_layers):
    """Build a fused multi-layer GRU kernel.

    Kernel refs (in order):
      x_ref : (T*B, D_in)  time-major flattened input, row t*B + b = x[b, t]
      per layer l: wi_l (D_l, 3H), wh_l (H, 3H), bi_l (1, 3H), bh_l (1, 3H)
      out_ref: (B, T*H)    batch-first output; h_t lives in columns [t*H:(t+1)*H]
    """

    def kernel(*refs):
        x_ref, out_ref = refs[0], refs[-1]
        p = refs[1:-1]

        seq = x_ref[...].astype(jnp.float32)                  # (T*B, D_in)
        rows = None
        for l in range(num_layers):
            wi = p[4 * l][...]                                 # (D_l, 3H)
            wh = p[4 * l + 1][...]                             # (H, 3H)
            bi = p[4 * l + 2][...]                             # (1, 3H)
            bh = p[4 * l + 3][...]                             # (1, 3H)

            # Hoisted input projection for ALL timesteps of this layer.
            gi = jnp.dot(seq, wi,
                         preferred_element_type=jnp.float32) + bi   # (T*B, 3H)
            bh_b = jnp.broadcast_to(bh, (B, 3 * H))            # hoisted broadcast

            h = jnp.zeros((B, H), jnp.float32)
            rows = []
            for t in range(T):                                 # fully unrolled
                gi_t = gi[t * B:(t + 1) * B]                   # static slice (B, 3H)
                gh = jnp.dot(h, wh,
                             preferred_element_type=jnp.float32) + bh_b
                r = jax.nn.sigmoid(gi_t[:, :H] + gh[:, :H])
                z = jax.nn.sigmoid(gi_t[:, H:2 * H] + gh[:, H:2 * H])
                n = jnp.tanh(gi_t[:, 2 * H:] + r * gh[:, 2 * H:])
                h = (1.0 - z) * n + z * h
                rows.append(h)

            if l + 1 < num_layers:
                # Inter-layer activations stay on chip (no HBM round trip).
                seq = jnp.concatenate(rows, axis=0)            # (T*B, H)

        # Lane-dense output slab, stored once: out[b, t*H + j] = h_t[b, j].
        out = jnp.concatenate(rows, axis=1)                    # (B, T*H)
        out_ref[...] = out.astype(out_ref.dtype)

    return kernel


def gru_wrapper_forward(x_btd, layers):
    """GRUWrapper.forward: x (B, T, D_in), batch_first=True -> (B, T, H).

    `layers`: list of (w_ih (3H, D_l), w_hh (3H, H), b_ih (3H,), b_hh (3H,))
    in PyTorch layout / gate order (r, z, n); h0 = 0 (PyTorch default).
    """
    B, T, D_in = x_btd.shape
    H = layers[0][1].shape[1]
    num_layers = len(layers)

    # Time-major flattened input: row t*B + b = x[b, t].  (Tiny layout op.)
    xt = jnp.transpose(x_btd, (1, 0, 2)).reshape(T * B, D_in)

    params = []
    for (w_ih, w_hh, b_ih, b_hh) in layers:
        params += [w_ih.T, w_hh.T,                             # (D, 3H), (H, 3H)
                   b_ih.reshape(1, 3 * H), b_hh.reshape(1, 3 * H)]

    vmem = pl.BlockSpec(memory_space=pltpu.MemorySpace.VMEM)
    out2d = pl.pallas_call(
        _make_gru_kernel(T, B, H, num_layers),
        out_shape=jax.ShapeDtypeStruct((B, T * H), x_btd.dtype),
        in_specs=[vmem] * (1 + len(params)),
        out_specs=vmem,
    )(xt, *params)

    # Free reshape back to batch_first (B, T, H).
    return out2d.reshape(B, T, H)


def gru_reference(x_btd, layers):
    """Pure-JAX reference matching torch.nn.GRU(batch_first=True)."""
    h_seq = jnp.transpose(x_btd, (1, 0, 2))
    B = x_btd.shape[0]
    for (w_ih, w_hh, b_ih, b_hh) in layers:
        H = w_hh.shape[1]

        def step(h, x_t, w_ih=w_ih, w_hh=w_hh, b_ih=b_ih, b_hh=b_hh):
            gi = x_t @ w_ih.T + b_ih
            gh = h @ w_hh.T + b_hh
            ir, iz, inn = jnp.split(gi, 3, axis=-1)
            hr, hz, hn = jnp.split(gh, 3, axis=-1)
            r = jax.nn.sigmoid(ir + hr)
            z = jax.nn.sigmoid(iz + hz)
            n = jnp.tanh(inn + r * hn)
            h_new = (1.0 - z) * n + z * h
            return h_new, h_new

        h0 = jnp.zeros((B, H), x_btd.dtype)
        _, h_seq = lax.scan(step, h0, h_seq)
    return jnp.transpose(h_seq, (1, 0, 2))


if __name__ == "__main__":
    # Module config: GRUWrapper(input_size=4, hidden_size=32, num_layers=2,
    #                           batch_first=True)
    B, T, D_IN, H, L = 2, 8, 4, 32, 2

    key = jax.random.PRNGKey(0)
    key, xk = jax.random.split(key)
    x = jax.random.normal(xk, (B, T, D_IN), jnp.float32)

    # Deterministic parameter init, matching PyTorch's U(-1/sqrt(H), 1/sqrt(H)).
    bound = 1.0 / np.sqrt(H)
    layers = []
    for layer_idx in range(L):
        din = D_IN if layer_idx == 0 else H
        key, k1, k2, k3, k4 = jax.random.split(key, 5)
        w_ih = jax.random.uniform(k1, (3 * H, din), jnp.float32, -bound, bound)
        w_hh = jax.random.uniform(k2, (3 * H, H), jnp.float32, -bound, bound)
        b_ih = jax.random.uniform(k3, (3 * H,), jnp.float32, -bound, bound)
        b_hh = jax.random.uniform(k4, (3 * H,), jnp.float32, -bound, bound)
        layers.append((w_ih, w_hh, b_ih, b_hh))

    out = gru_wrapper_forward(x, layers)
    out = jax.block_until_ready(out)
    assert out.shape == (B, T, H)

    ref = gru_reference(x, layers)
    np.testing.assert_allclose(np.asarray(out), np.asarray(ref),
                               rtol=1e-5, atol=1e-5)
    print("KERNEL_OK")
</pallas_src>

<mosaic_0001>
module attributes {stable_mosaic.version = 11 : i64} {
  func.func @kernel(%arg0: memref<16x4xf32, #tpu.memory_space<vmem>>, %arg1: memref<4x96xf32, #tpu.memory_space<vmem>>, %arg2: memref<32x96xf32, #tpu.memory_space<vmem>>, %arg3: memref<1x96xf32, #tpu.memory_space<vmem>>, %arg4: memref<1x96xf32, #tpu.memory_space<vmem>>, %arg5: memref<32x96xf32, #tpu.memory_space<vmem>>, %arg6: memref<32x96xf32, #tpu.memory_space<vmem>>, %arg7: memref<1x96xf32, #tpu.memory_space<vmem>>, %arg8: memref<1x96xf32, #tpu.memory_space<vmem>>, %arg9: memref<2x256xf32, #tpu.memory_space<vmem>>) attributes {dimension_semantics = [], scalar_prefetch = 0 : i64, scratch_operands = 0 : i64, tpu.core_type = #tpu.core_type<tc>} {
    %c0 = arith.constant 0 : index
    %c0_0 = arith.constant 0 : index
    %0 = vector.load %arg0[%c0, %c0_0] : memref<16x4xf32, #tpu.memory_space<vmem>>, vector<16x4xf32>
    %c0_1 = arith.constant 0 : index
    %c0_2 = arith.constant 0 : index
    %1 = vector.load %arg1[%c0_1, %c0_2] : memref<4x96xf32, #tpu.memory_space<vmem>>, vector<4x96xf32>
    %c0_3 = arith.constant 0 : index
    %c0_4 = arith.constant 0 : index
    %2 = vector.load %arg2[%c0_3, %c0_4] : memref<32x96xf32, #tpu.memory_space<vmem>>, vector<32x96xf32>
    %c0_5 = arith.constant 0 : index
    %c0_6 = arith.constant 0 : index
    %3 = vector.load %arg3[%c0_5, %c0_6] : memref<1x96xf32, #tpu.memory_space<vmem>>, vector<1x96xf32>
    %c0_7 = arith.constant 0 : index
    %c0_8 = arith.constant 0 : index
    %4 = vector.load %arg4[%c0_7, %c0_8] : memref<1x96xf32, #tpu.memory_space<vmem>>, vector<1x96xf32>
    %cst = arith.constant dense<0.000000e+00> : vector<16x96xf32>
    %5 = tpu.matmul %0, %1, %cst {dimension_numbers = #tpu.dot_dimension_numbers<[1], [0], [0], [1], [0, 0, 1, 1], [], []>} : vector<16x4xf32>, vector<4x96xf32>, vector<16x96xf32> -> vector<16x96xf32>
    %6 = vector.broadcast %3 : vector<1x96xf32> to vector<16x96xf32>
    %7 = arith.addf %5, %6 : vector<16x96xf32>
    %8 = vector.shape_cast %4 : vector<1x96xf32> to vector<1x96xf32>
    %9 = vector.broadcast %8 : vector<1x96xf32> to vector<2x96xf32>
    %cst_9 = arith.constant 0.000000e+00 : f32
    %10 = vector.broadcast %cst_9 : f32 to vector<2x32xf32>
    %11 = vector.extract_strided_slice %7 {offsets = [0, 0], sizes = [2, 96], strides = [1, 1]} : vector<16x96xf32> to vector<2x96xf32>
    %cst_10 = arith.constant dense<0.000000e+00> : vector<2x96xf32>
    %12 = tpu.matmul %10, %2, %cst_10 {dimension_numbers = #tpu.dot_dimension_numbers<[1], [0], [0], [1], [0, 0, 1, 1], [], []>} : vector<2x32xf32>, vector<32x96xf32>, vector<2x96xf32> -> vector<2x96xf32>
    %13 = arith.addf %12, %9 : vector<2x96xf32>
    %14 = vector.extract_strided_slice %11 {offsets = [0, 0], sizes = [2, 32], strides = [1, 1]} : vector<2x96xf32> to vector<2x32xf32>
    %15 = vector.extract_strided_slice %13 {offsets = [0, 0], sizes = [2, 32], strides = [1, 1]} : vector<2x96xf32> to vector<2x32xf32>
    %16 = arith.addf %14, %15 : vector<2x32xf32>
    %17 = arith.negf %16 : vector<2x32xf32>
    %18 = math.exp %17 : vector<2x32xf32>
    %cst_11 = arith.constant 1.000000e+00 : f32
    %19 = vector.broadcast %cst_11 : f32 to vector<2x32xf32>
    %20 = arith.addf %19, %18 : vector<2x32xf32>
    %21 = arith.divf %19, %20 : vector<2x32xf32>
    %22 = vector.extract_strided_slice %11 {offsets = [0, 32], sizes = [2, 32], strides = [1, 1]} : vector<2x96xf32> to vector<2x32xf32>
    %23 = vector.extract_strided_slice %13 {offsets = [0, 32], sizes = [2, 32], strides = [1, 1]} : vector<2x96xf32> to vector<2x32xf32>
    %24 = arith.addf %22, %23 : vector<2x32xf32>
    %25 = arith.negf %24 : vector<2x32xf32>
    %26 = math.exp %25 : vector<2x32xf32>
    %cst_12 = arith.constant 1.000000e+00 : f32
    %27 = vector.broadcast %cst_12 : f32 to vector<2x32xf32>
    %28 = arith.addf %27, %26 : vector<2x32xf32>
    %29 = arith.divf %27, %28 : vector<2x32xf32>
    %30 = vector.extract_strided_slice %11 {offsets = [0, 64], sizes = [2, 32], strides = [1, 1]} : vector<2x96xf32> to vector<2x32xf32>
    %31 = vector.extract_strided_slice %13 {offsets = [0, 64], sizes = [2, 32], strides = [1, 1]} : vector<2x96xf32> to vector<2x32xf32>
    %32 = arith.mulf %21, %31 : vector<2x32xf32>
    %33 = arith.addf %30, %32 : vector<2x32xf32>
    %34 = math.tanh %33 : vector<2x32xf32>
    %cst_13 = arith.constant 1.000000e+00 : f32
    %35 = vector.broadcast %cst_13 : f32 to vector<2x32xf32>
    %36 = arith.subf %35, %29 : vector<2x32xf32>
    %37 = arith.mulf %36, %34 : vector<2x32xf32>
    %38 = arith.mulf %29, %10 : vector<2x32xf32>
    %39 = arith.addf %37, %38 : vector<2x32xf32>
    %40 = vector.extract_strided_slice %7 {offsets = [2, 0], sizes = [2, 96], strides = [1, 1]} : vector<16x96xf32> to vector<2x96xf32>
    %cst_14 = arith.constant dense<0.000000e+00> : vector<2x96xf32>
    %41 = tpu.matmul %39, %2, %cst_14 {dimension_numbers = #tpu.dot_dimension_numbers<[1], [0], [0], [1], [0, 0, 1, 1], [], []>} : vector<2x32xf32>, vector<32x96xf32>, vector<2x96xf32> -> vector<2x96xf32>
    %42 = arith.addf %41, %9 : vector<2x96xf32>
    %43 = vector.extract_strided_slice %40 {offsets = [0, 0], sizes = [2, 32], strides = [1, 1]} : vector<2x96xf32> to vector<2x32xf32>
    %44 = vector.extract_strided_slice %42 {offsets = [0, 0], sizes = [2, 32], strides = [1, 1]} : vector<2x96xf32> to vector<2x32xf32>
    %45 = arith.addf %43, %44 : vector<2x32xf32>
    %46 = arith.negf %45 : vector<2x32xf32>
    %47 = math.exp %46 : vector<2x32xf32>
    %cst_15 = arith.constant 1.000000e+00 : f32
    %48 = vector.broadcast %cst_15 : f32 to vector<2x32xf32>
    %49 = arith.addf %48, %47 : vector<2x32xf32>
    %50 = arith.divf %48, %49 : vector<2x32xf32>
    %51 = vector.extract_strided_slice %40 {offsets = [0, 32], sizes = [2, 32], strides = [1, 1]} : vector<2x96xf32> to vector<2x32xf32>
    %52 = vector.extract_strided_slice %42 {offsets = [0, 32], sizes = [2, 32], strides = [1, 1]} : vector<2x96xf32> to vector<2x32xf32>
    %53 = arith.addf %51, %52 : vector<2x32xf32>
    %54 = arith.negf %53 : vector<2x32xf32>
    %55 = math.exp %54 : vector<2x32xf32>
    %cst_16 = arith.constant 1.000000e+00 : f32
    %56 = vector.broadcast %cst_16 : f32 to vector<2x32xf32>
    %57 = arith.addf %56, %55 : vector<2x32xf32>
    %58 = arith.divf %56, %57 : vector<2x32xf32>
    %59 = vector.extract_strided_slice %40 {offsets = [0, 64], sizes = [2, 32], strides = [1, 1]} : vector<2x96xf32> to vector<2x32xf32>
    %60 = vector.extract_strided_slice %42 {offsets = [0, 64], sizes = [2, 32], strides = [1, 1]} : vector<2x96xf32> to vector<2x32xf32>
    %61 = arith.mulf %50, %60 : vector<2x32xf32>
    %62 = arith.addf %59, %61 : vector<2x32xf32>
    %63 = math.tanh %62 : vector<2x32xf32>
    %cst_17 = arith.constant 1.000000e+00 : f32
    %64 = vector.broadcast %cst_17 : f32 to vector<2x32xf32>
    %65 = arith.subf %64, %58 : vector<2x32xf32>
    %66 = arith.mulf %65, %63 : vector<2x32xf32>
    %67 = arith.mulf %58, %39 : vector<2x32xf32>
    %68 = arith.addf %66, %67 : vector<2x32xf32>
    %69 = vector.extract_strided_slice %7 {offsets = [4, 0], sizes = [2, 96], strides = [1, 1]} : vector<16x96xf32> to vector<2x96xf32>
    %cst_18 = arith.constant dense<0.000000e+00> : vector<2x96xf32>
    %70 = tpu.matmul %68, %2, %cst_18 {dimension_numbers = #tpu.dot_dimension_numbers<[1], [0], [0], [1], [0, 0, 1, 1], [], []>} : vector<2x32xf32>, vector<32x96xf32>, vector<2x96xf32> -> vector<2x96xf32>
    %71 = arith.addf %70, %9 : vector<2x96xf32>
    %72 = vector.extract_strided_slice %69 {offsets = [0, 0], sizes = [2, 32], strides = [1, 1]} : vector<2x96xf32> to vector<2x32xf32>
    %73 = vector.extract_strided_slice %71 {offsets = [0, 0], sizes = [2, 32], strides = [1, 1]} : vector<2x96xf32> to vector<2x32xf32>
    %74 = arith.addf %72, %73 : vector<2x32xf32>
    %75 = arith.negf %74 : vector<2x32xf32>
    %76 = math.exp %75 : vector<2x32xf32>
    %cst_19 = arith.constant 1.000000e+00 : f32
    %77 = vector.broadcast %cst_19 : f32 to vector<2x32xf32>
    %78 = arith.addf %77, %76 : vector<2x32xf32>
    %79 = arith.divf %77, %78 : vector<2x32xf32>
    %80 = vector.extract_strided_slice %69 {offsets = [0, 32], sizes = [2, 32], strides = [1, 1]} : vector<2x96xf32> to vector<2x32xf32>
    %81 = vector.extract_strided_slice %71 {offsets = [0, 32], sizes = [2, 32], strides = [1, 1]} : vector<2x96xf32> to vector<2x32xf32>
    %82 = arith.addf %80, %81 : vector<2x32xf32>
    %83 = arith.negf %82 : vector<2x32xf32>
    %84 = math.exp %83 : vector<2x32xf32>
    %cst_20 = arith.constant 1.000000e+00 : f32
    %85 = vector.broadcast %cst_20 : f32 to vector<2x32xf32>
    %86 = arith.addf %85, %84 : vector<2x32xf32>
    %87 = arith.divf %85, %86 : vector<2x32xf32>
    %88 = vector.extract_strided_slice %69 {offsets = [0, 64], sizes = [2, 32], strides = [1, 1]} : vector<2x96xf32> to vector<2x32xf32>
    %89 = vector.extract_strided_slice %71 {offsets = [0, 64], sizes = [2, 32], strides = [1, 1]} : vector<2x96xf32> to vector<2x32xf32>
    %90 = arith.mulf %79, %89 : vector<2x32xf32>
    %91 = arith.addf %88, %90 : vector<2x32xf32>
    %92 = math.tanh %91 : vector<2x32xf32>
    %cst_21 = arith.constant 1.000000e+00 : f32
    %93 = vector.broadcast %cst_21 : f32 to vector<2x32xf32>
    %94 = arith.subf %93, %87 : vector<2x32xf32>
    %95 = arith.mulf %94, %92 : vector<2x32xf32>
    %96 = arith.mulf %87, %68 : vector<2x32xf32>
    %97 = arith.addf %95, %96 : vector<2x32xf32>
    %98 = vector.extract_strided_slice %7 {offsets = [6, 0], sizes = [2, 96], strides = [1, 1]} : vector<16x96xf32> to vector<2x96xf32>
    %cst_22 = arith.constant dense<0.000000e+00> : vector<2x96xf32>
    %99 = tpu.matmul %97, %2, %cst_22 {dimension_numbers = #tpu.dot_dimension_numbers<[1], [0], [0], [1], [0, 0, 1, 1], [], []>} : vector<2x32xf32>, vector<32x96xf32>, vector<2x96xf32> -> vector<2x96xf32>
    %100 = arith.addf %99, %9 : vector<2x96xf32>
    %101 = vector.extract_strided_slice %98 {offsets = [0, 0], sizes = [2, 32], strides = [1, 1]} : vector<2x96xf32> to vector<2x32xf32>
    %102 = vector.extract_strided_slice %100 {offsets = [0, 0], sizes = [2, 32], strides = [1, 1]} : vector<2x96xf32> to vector<2x32xf32>
    %103 = arith.addf %101, %102 : vector<2x32xf32>
    %104 = arith.negf %103 : vector<2x32xf32>
    %105 = math.exp %104 : vector<2x32xf32>
    %cst_23 = arith.constant 1.000000e+00 : f32
    %106 = vector.broadcast %cst_23 : f32 to vector<2x32xf32>
    %107 = arith.addf %106, %105 : vector<2x32xf32>
    %108 = arith.divf %106, %107 : vector<2x32xf32>
    %109 = vector.extract_strided_slice %98 {offsets = [0, 32], sizes = [2, 32], strides = [1, 1]} : vector<2x96xf32> to vector<2x32xf32>
    %110 = vector.extract_strided_slice %100 {offsets = [0, 32], sizes = [2, 32], strides = [1, 1]} : vector<2x96xf32> to vector<2x32xf32>
    %111 = arith.addf %109, %110 : vector<2x32xf32>
    %112 = arith.negf %111 : vector<2x32xf32>
    %113 = math.exp %112 : vector<2x32xf32>
    %cst_24 = arith.constant 1.000000e+00 : f32
    %114 = vector.broadcast %cst_24 : f32 to vector<2x32xf32>
    %115 = arith.addf %114, %113 : vector<2x32xf32>
    %116 = arith.divf %114, %115 : vector<2x32xf32>
    %117 = vector.extract_strided_slice %98 {offsets = [0, 64], sizes = [2, 32], strides = [1, 1]} : vector<2x96xf32> to vector<2x32xf32>
    %118 = vector.extract_strided_slice %100 {offsets = [0, 64], sizes = [2, 32], strides = [1, 1]} : vector<2x96xf32> to vector<2x32xf32>
    %119 = arith.mulf %108, %118 : vector<2x32xf32>
    %120 = arith.addf %117, %119 : vector<2x32xf32>
    %121 = math.tanh %120 : vector<2x32xf32>
    %cst_25 = arith.constant 1.000000e+00 : f32
    %122 = vector.broadcast %cst_25 : f32 to vector<2x32xf32>
    %123 = arith.subf %122, %116 : vector<2x32xf32>
    %124 = arith.mulf %123, %121 : vector<2x32xf32>
    %125 = arith.mulf %116, %97 : vector<2x32xf32>
    %126 = arith.addf %124, %125 : vector<2x32xf32>
    %127 = vector.extract_strided_slice %7 {offsets = [8, 0], sizes = [2, 96], strides = [1, 1]} : vector<16x96xf32> to vector<2x96xf32>
    %cst_26 = arith.constant dense<0.000000e+00> : vector<2x96xf32>
    %128 = tpu.matmul %126, %2, %cst_26 {dimension_numbers = #tpu.dot_dimension_numbers<[1], [0], [0], [1], [0, 0, 1, 1], [], []>} : vector<2x32xf32>, vector<32x96xf32>, vector<2x96xf32> -> vector<2x96xf32>
    %129 = arith.addf %128, %9 : vector<2x96xf32>
    %130 = vector.extract_strided_slice %127 {offsets = [0, 0], sizes = [2, 32], strides = [1, 1]} : vector<2x96xf32> to vector<2x32xf32>
    %131 = vector.extract_strided_slice %129 {offsets = [0, 0], sizes = [2, 32], strides = [1, 1]} : vector<2x96xf32> to vector<2x32xf32>
    %132 = arith.addf %130, %131 : vector<2x32xf32>
    %133 = arith.negf %132 : vector<2x32xf32>
    %134 = math.exp %133 : vector<2x32xf32>
    %cst_27 = arith.constant 1.000000e+00 : f32
    %135 = vector.broadcast %cst_27 : f32 to vector<2x32xf32>
    %136 = arith.addf %135, %134 : vector<2x32xf32>
    %137 = arith.divf %135, %136 : vector<2x32xf32>
    %138 = vector.extract_strided_slice %127 {offsets = [0, 32], sizes = [2, 32], strides = [1, 1]} : vector<2x96xf32> to vector<2x32xf32>
    %139 = vector.extract_strided_slice %129 {offsets = [0, 32], sizes = [2, 32], strides = [1, 1]} : vector<2x96xf32> to vector<2x32xf32>
    %140 = arith.addf %138, %139 : vector<2x32xf32>
    %141 = arith.negf %140 : vector<2x32xf32>
    %142 = math.exp %141 : vector<2x32xf32>
    %cst_28 = arith.constant 1.000000e+00 : f32
    %143 = vector.broadcast %cst_28 : f32 to vector<2x32xf32>
    %144 = arith.addf %143, %142 : vector<2x32xf32>
    %145 = arith.divf %143, %144 : vector<2x32xf32>
    %146 = vector.extract_strided_slice %127 {offsets = [0, 64], sizes = [2, 32], strides = [1, 1]} : vector<2x96xf32> to vector<2x32xf32>
    %147 = vector.extract_strided_slice %129 {offsets = [0, 64], sizes = [2, 32], strides = [1, 1]} : vector<2x96xf32> to vector<2x32xf32>
    %148 = arith.mulf %137, %147 : vector<2x32xf32>
    %149 = arith.addf %146, %148 : vector<2x32xf32>
    %150 = math.tanh %149 : vector<2x32xf32>
    %cst_29 = arith.constant 1.000000e+00 : f32
    %151 = vector.broadcast %cst_29 : f32 to vector<2x32xf32>
    %152 = arith.subf %151, %145 : vector<2x32xf32>
    %153 = arith.mulf %152, %150 : vector<2x32xf32>
    %154 = arith.mulf %145, %126 : vector<2x32xf32>
    %155 = arith.addf %153, %154 : vector<2x32xf32>
    %156 = vector.extract_strided_slice %7 {offsets = [10, 0], sizes = [2, 96], strides = [1, 1]} : vector<16x96xf32> to vector<2x96xf32>
    %cst_30 = arith.constant dense<0.000000e+00> : vector<2x96xf32>
    %157 = tpu.matmul %155, %2, %cst_30 {dimension_numbers = #tpu.dot_dimension_numbers<[1], [0], [0], [1], [0, 0, 1, 1], [], []>} : vector<2x32xf32>, vector<32x96xf32>, vector<2x96xf32> -> vector<2x96xf32>
    %158 = arith.addf %157, %9 : vector<2x96xf32>
    %159 = vector.extract_strided_slice %156 {offsets = [0, 0], sizes = [2, 32], strides = [1, 1]} : vector<2x96xf32> to vector<2x32xf32>
    %160 = vector.extract_strided_slice %158 {offsets = [0, 0], sizes = [2, 32], strides = [1, 1]} : vector<2x96xf32> to vector<2x32xf32>
    %161 = arith.addf %159, %160 : vector<2x32xf32>
    %162 = arith.negf %161 : vector<2x32xf32>
    %163 = math.exp %162 : vector<2x32xf32>
    %cst_31 = arith.constant 1.000000e+00 : f32
    %164 = vector.broadcast %cst_31 : f32 to vector<2x32xf32>
    %165 = arith.addf %164, %163 : vector<2x32xf32>
    %166 = arith.divf %164, %165 : vector<2x32xf32>
    %167 = vector.extract_strided_slice %156 {offsets = [0, 32], sizes = [2, 32], strides = [1, 1]} : vector<2x96xf32> to vector<2x32xf32>
    %168 = vector.extract_strided_slice %158 {offsets = [0, 32], sizes = [2, 32], strides = [1, 1]} : vector<2x96xf32> to vector<2x32xf32>
    %169 = arith.addf %167, %168 : vector<2x32xf32>
    %170 = arith.negf %169 : vector<2x32xf32>
    %171 = math.exp %170 : vector<2x32xf32>
    %cst_32 = arith.constant 1.000000e+00 : f32
    %172 = vector.broadcast %cst_32 : f32 to vector<2x32xf32>
    %173 = arith.addf %172, %171 : vector<2x32xf32>
    %174 = arith.divf %172, %173 : vector<2x32xf32>
    %175 = vector.extract_strided_slice %156 {offsets = [0, 64], sizes = [2, 32], strides = [1, 1]} : vector<2x96xf32> to vector<2x32xf32>
    %176 = vector.extract_strided_slice %158 {offsets = [0, 64], sizes = [2, 32], strides = [1, 1]} : vector<2x96xf32> to vector<2x32xf32>
    %177 = arith.mulf %166, %176 : vector<2x32xf32>
    %178 = arith.addf %175, %177 : vector<2x32xf32>
    %179 = math.tanh %178 : vector<2x32xf32>
    %cst_33 = arith.constant 1.000000e+00 : f32
    %180 = vector.broadcast %cst_33 : f32 to vector<2x32xf32>
    %181 = arith.subf %180, %174 : vector<2x32xf32>
    %182 = arith.mulf %181, %179 : vector<2x32xf32>
    %183 = arith.mulf %174, %155 : vector<2x32xf32>
    %184 = arith.addf %182, %183 : vector<2x32xf32>
    %185 = vector.extract_strided_slice %7 {offsets = [12, 0], sizes = [2, 96], strides = [1, 1]} : vector<16x96xf32> to vector<2x96xf32>
    %cst_34 = arith.constant dense<0.000000e+00> : vector<2x96xf32>
    %186 = tpu.matmul %184, %2, %cst_34 {dimension_numbers = #tpu.dot_dimension_numbers<[1], [0], [0], [1], [0, 0, 1, 1], [], []>} : vector<2x32xf32>, vector<32x96xf32>, vector<2x96xf32> -> vector<2x96xf32>
    %187 = arith.addf %186, %9 : vector<2x96xf32>
    %188 = vector.extract_strided_slice %185 {offsets = [0, 0], sizes = [2, 32], strides = [1, 1]} : vector<2x96xf32> to vector<2x32xf32>
    %189 = vector.extract_strided_slice %187 {offsets = [0, 0], sizes = [2, 32], strides = [1, 1]} : vector<2x96xf32> to vector<2x32xf32>
    %190 = arith.addf %188, %189 : vector<2x32xf32>
    %191 = arith.negf %190 : vector<2x32xf32>
    %192 = math.exp %191 : vector<2x32xf32>
    %cst_35 = arith.constant 1.000000e+00 : f32
    %193 = vector.broadcast %cst_35 : f32 to vector<2x32xf32>
    %194 = arith.addf %193, %192 : vector<2x32xf32>
    %195 = arith.divf %193, %194 : vector<2x32xf32>
    %196 = vector.extract_strided_slice %185 {offsets = [0, 32], sizes = [2, 32], strides = [1, 1]} : vector<2x96xf32> to vector<2x32xf32>
    %197 = vector.extract_strided_slice %187 {offsets = [0, 32], sizes = [2, 32], strides = [1, 1]} : vector<2x96xf32> to vector<2x32xf32>
    %198 = arith.addf %196, %197 : vector<2x32xf32>
    %199 = arith.negf %198 : vector<2x32xf32>
    %200 = math.exp %199 : vector<2x32xf32>
    %cst_36 = arith.constant 1.000000e+00 : f32
    %201 = vector.broadcast %cst_36 : f32 to vector<2x32xf32>
    %202 = arith.addf %201, %200 : vector<2x32xf32>
    %203 = arith.divf %201, %202 : vector<2x32xf32>
    %204 = vector.extract_strided_slice %185 {offsets = [0, 64], sizes = [2, 32], strides = [1, 1]} : vector<2x96xf32> to vector<2x32xf32>
    %205 = vector.extract_strided_slice %187 {offsets = [0, 64], sizes = [2, 32], strides = [1, 1]} : vector<2x96xf32> to vector<2x32xf32>
    %206 = arith.mulf %195, %205 : vector<2x32xf32>
    %207 = arith.addf %204, %206 : vector<2x32xf32>
    %208 = math.tanh %207 : vector<2x32xf32>
    %cst_37 = arith.constant 1.000000e+00 : f32
    %209 = vector.broadcast %cst_37 : f32 to vector<2x32xf32>
    %210 = arith.subf %209, %203 : vector<2x32xf32>
    %211 = arith.mulf %210, %208 : vector<2x32xf32>
    %212 = arith.mulf %203, %184 : vector<2x32xf32>
    %213 = arith.addf %211, %212 : vector<2x32xf32>
    %214 = vector.extract_strided_slice %7 {offsets = [14, 0], sizes = [2, 96], strides = [1, 1]} : vector<16x96xf32> to vector<2x96xf32>
    %cst_38 = arith.constant dense<0.000000e+00> : vector<2x96xf32>
    %215 = tpu.matmul %213, %2, %cst_38 {dimension_numbers = #tpu.dot_dimension_numbers<[1], [0], [0], [1], [0, 0, 1, 1], [], []>} : vector<2x32xf32>, vector<32x96xf32>, vector<2x96xf32> -> vector<2x96xf32>
    %216 = arith.addf %215, %9 : vector<2x96xf32>
    %217 = vector.extract_strided_slice %214 {offsets = [0, 0], sizes = [2, 32], strides = [1, 1]} : vector<2x96xf32> to vector<2x32xf32>
    %218 = vector.extract_strided_slice %216 {offsets = [0, 0], sizes = [2, 32], strides = [1, 1]} : vector<2x96xf32> to vector<2x32xf32>
    %219 = arith.addf %217, %218 : vector<2x32xf32>
    %220 = arith.negf %219 : vector<2x32xf32>
    %221 = math.exp %220 : vector<2x32xf32>
    %cst_39 = arith.constant 1.000000e+00 : f32
    %222 = vector.broadcast %cst_39 : f32 to vector<2x32xf32>
    %223 = arith.addf %222, %221 : vector<2x32xf32>
    %224 = arith.divf %222, %223 : vector<2x32xf32>
    %225 = vector.extract_strided_slice %214 {offsets = [0, 32], sizes = [2, 32], strides = [1, 1]} : vector<2x96xf32> to vector<2x32xf32>
    %226 = vector.extract_strided_slice %216 {offsets = [0, 32], sizes = [2, 32], strides = [1, 1]} : vector<2x96xf32> to vector<2x32xf32>
    %227 = arith.addf %225, %226 : vector<2x32xf32>
    %228 = arith.negf %227 : vector<2x32xf32>
    %229 = math.exp %228 : vector<2x32xf32>
    %cst_40 = arith.constant 1.000000e+00 : f32
    %230 = vector.broadcast %cst_40 : f32 to vector<2x32xf32>
    %231 = arith.addf %230, %229 : vector<2x32xf32>
    %232 = arith.divf %230, %231 : vector<2x32xf32>
    %233 = vector.extract_strided_slice %214 {offsets = [0, 64], sizes = [2, 32], strides = [1, 1]} : vector<2x96xf32> to vector<2x32xf32>
    %234 = vector.extract_strided_slice %216 {offsets = [0, 64], sizes = [2, 32], strides = [1, 1]} : vector<2x96xf32> to vector<2x32xf32>
    %235 = arith.mulf %224, %234 : vector<2x32xf32>
    %236 = arith.addf %233, %235 : vector<2x32xf32>
    %237 = math.tanh %236 : vector<2x32xf32>
    %cst_41 = arith.constant 1.000000e+00 : f32
    %238 = vector.broadcast %cst_41 : f32 to vector<2x32xf32>
    %239 = arith.subf %238, %232 : vector<2x32xf32>
    %240 = arith.mulf %239, %237 : vector<2x32xf32>
    %241 = arith.mulf %232, %213 : vector<2x32xf32>
    %242 = arith.addf %240, %241 : vector<2x32xf32>
    %243 = tpu.concatenate %39, %68, %97, %126, %155, %184, %213, %242 in 0 : vector<2x32xf32>, vector<2x32xf32>, vector<2x32xf32>, vector<2x32xf32>, vector<2x32xf32>, vector<2x32xf32>, vector<2x32xf32>, vector<2x32xf32> -> vector<16x32xf32>
    %c0_42 = arith.constant 0 : index
    %c0_43 = arith.constant 0 : index
    %244 = vector.load %arg5[%c0_42, %c0_43] : memref<32x96xf32, #tpu.memory_space<vmem>>, vector<32x96xf32>
    %c0_44 = arith.constant 0 : index
    %c0_45 = arith.constant 0 : index
    %245 = vector.load %arg6[%c0_44, %c0_45] : memref<32x96xf32, #tpu.memory_space<vmem>>, vector<32x96xf32>
    %c0_46 = arith.constant 0 : index
    %c0_47 = arith.constant 0 : index
    %246 = vector.load %arg7[%c0_46, %c0_47] : memref<1x96xf32, #tpu.memory_space<vmem>>, vector<1x96xf32>
    %c0_48 = arith.constant 0 : index
    %c0_49 = arith.constant 0 : index
    %247 = vector.load %arg8[%c0_48, %c0_49] : memref<1x96xf32, #tpu.memory_space<vmem>>, vector<1x96xf32>
    %cst_50 = arith.constant dense<0.000000e+00> : vector<16x96xf32>
    %248 = tpu.matmul %243, %244, %cst_50 {dimension_numbers = #tpu.dot_dimension_numbers<[1], [0], [0], [1], [0, 0, 1, 1], [], []>} : vector<16x32xf32>, vector<32x96xf32>, vector<16x96xf32> -> vector<16x96xf32>
    %249 = vector.broadcast %246 : vector<1x96xf32> to vector<16x96xf32>
    %250 = arith.addf %248, %249 : vector<16x96xf32>
    %251 = vector.shape_cast %247 : vector<1x96xf32> to vector<1x96xf32>
    %252 = vector.broadcast %251 : vector<1x96xf32> to vector<2x96xf32>
    %cst_51 = arith.constant 0.000000e+00 : f32
    %253 = vector.broadcast %cst_51 : f32 to vector<2x32xf32>
    %254 = vector.extract_strided_slice %250 {offsets = [0, 0], sizes = [2, 96], strides = [1, 1]} : vector<16x96xf32> to vector<2x96xf32>
    %cst_52 = arith.constant dense<0.000000e+00> : vector<2x96xf32>
    %255 = tpu.matmul %253, %245, %cst_52 {dimension_numbers = #tpu.dot_dimension_numbers<[1], [0], [0], [1], [0, 0, 1, 1], [], []>} : vector<2x32xf32>, vector<32x96xf32>, vector<2x96xf32> -> vector<2x96xf32>
    %256 = arith.addf %255, %252 : vector<2x96xf32>
    %257 = vector.extract_strided_slice %254 {offsets = [0, 0], sizes = [2, 32], strides = [1, 1]} : vector<2x96xf32> to vector<2x32xf32>
    %258 = vector.extract_strided_slice %256 {offsets = [0, 0], sizes = [2, 32], strides = [1, 1]} : vector<2x96xf32> to vector<2x32xf32>
    %259 = arith.addf %257, %258 : vector<2x32xf32>
    %260 = arith.negf %259 : vector<2x32xf32>
    %261 = math.exp %260 : vector<2x32xf32>
    %cst_53 = arith.constant 1.000000e+00 : f32
    %262 = vector.broadcast %cst_53 : f32 to vector<2x32xf32>
    %263 = arith.addf %262, %261 : vector<2x32xf32>
    %264 = arith.divf %262, %263 : vector<2x32xf32>
    %265 = vector.extract_strided_slice %254 {offsets = [0, 32], sizes = [2, 32], strides = [1, 1]} : vector<2x96xf32> to vector<2x32xf32>
    %266 = vector.extract_strided_slice %256 {offsets = [0, 32], sizes = [2, 32], strides = [1, 1]} : vector<2x96xf32> to vector<2x32xf32>
    %267 = arith.addf %265, %266 : vector<2x32xf32>
    %268 = arith.negf %267 : vector<2x32xf32>
    %269 = math.exp %268 : vector<2x32xf32>
    %cst_54 = arith.constant 1.000000e+00 : f32
    %270 = vector.broadcast %cst_54 : f32 to vector<2x32xf32>
    %271 = arith.addf %270, %269 : vector<2x32xf32>
    %272 = arith.divf %270, %271 : vector<2x32xf32>
    %273 = vector.extract_strided_slice %254 {offsets = [0, 64], sizes = [2, 32], strides = [1, 1]} : vector<2x96xf32> to vector<2x32xf32>
    %274 = vector.extract_strided_slice %256 {offsets = [0, 64], sizes = [2, 32], strides = [1, 1]} : vector<2x96xf32> to vector<2x32xf32>
    %275 = arith.mulf %264, %274 : vector<2x32xf32>
    %276 = arith.addf %273, %275 : vector<2x32xf32>
    %277 = math.tanh %276 : vector<2x32xf32>
    %cst_55 = arith.constant 1.000000e+00 : f32
    %278 = vector.broadcast %cst_55 : f32 to vector<2x32xf32>
    %279 = arith.subf %278, %272 : vector<2x32xf32>
    %280 = arith.mulf %279, %277 : vector<2x32xf32>
    %281 = arith.mulf %272, %253 : vector<2x32xf32>
    %282 = arith.addf %280, %281 : vector<2x32xf32>
    %283 = vector.extract_strided_slice %250 {offsets = [2, 0], sizes = [2, 96], strides = [1, 1]} : vector<16x96xf32> to vector<2x96xf32>
    %cst_56 = arith.constant dense<0.000000e+00> : vector<2x96xf32>
    %284 = tpu.matmul %282, %245, %cst_56 {dimension_numbers = #tpu.dot_dimension_numbers<[1], [0], [0], [1], [0, 0, 1, 1], [], []>} : vector<2x32xf32>, vector<32x96xf32>, vector<2x96xf32> -> vector<2x96xf32>
    %285 = arith.addf %284, %252 : vector<2x96xf32>
    %286 = vector.extract_strided_slice %283 {offsets = [0, 0], sizes = [2, 32], strides = [1, 1]} : vector<2x96xf32> to vector<2x32xf32>
    %287 = vector.extract_strided_slice %285 {offsets = [0, 0], sizes = [2, 32], strides = [1, 1]} : vector<2x96xf32> to vector<2x32xf32>
    %288 = arith.addf %286, %287 : vector<2x32xf32>
    %289 = arith.negf %288 : vector<2x32xf32>
    %290 = math.exp %289 : vector<2x32xf32>
    %cst_57 = arith.constant 1.000000e+00 : f32
    %291 = vector.broadcast %cst_57 : f32 to vector<2x32xf32>
    %292 = arith.addf %291, %290 : vector<2x32xf32>
    %293 = arith.divf %291, %292 : vector<2x32xf32>
    %294 = vector.extract_strided_slice %283 {offsets = [0, 32], sizes = [2, 32], strides = [1, 1]} : vector<2x96xf32> to vector<2x32xf32>
    %295 = vector.extract_strided_slice %285 {offsets = [0, 32], sizes = [2, 32], strides = [1, 1]} : vector<2x96xf32> to vector<2x32xf32>
    %296 = arith.addf %294, %295 : vector<2x32xf32>
    %297 = arith.negf %296 : vector<2x32xf32>
    %298 = math.exp %297 : vector<2x32xf32>
    %cst_58 = arith.constant 1.000000e+00 : f32
    %299 = vector.broadcast %cst_58 : f32 to vector<2x32xf32>
    %300 = arith.addf %299, %298 : vector<2x32xf32>
    %301 = arith.divf %299, %300 : vector<2x32xf32>
    %302 = vector.extract_strided_slice %283 {offsets = [0, 64], sizes = [2, 32], strides = [1, 1]} : vector<2x96xf32> to vector<2x32xf32>
    %303 = vector.extract_strided_slice %285 {offsets = [0, 64], sizes = [2, 32], strides = [1, 1]} : vector<2x96xf32> to vector<2x32xf32>
    %304 = arith.mulf %293, %303 : vector<2x32xf32>
    %305 = arith.addf %302, %304 : vector<2x32xf32>
    %306 = math.tanh %305 : vector<2x32xf32>
    %cst_59 = arith.constant 1.000000e+00 : f32
    %307 = vector.broadcast %cst_59 : f32 to vector<2x32xf32>
    %308 = arith.subf %307, %301 : vector<2x32xf32>
    %309 = arith.mulf %308, %306 : vector<2x32xf32>
    %310 = arith.mulf %301, %282 : vector<2x32xf32>
    %311 = arith.addf %309, %310 : vector<2x32xf32>
    %312 = vector.extract_strided_slice %250 {offsets = [4, 0], sizes = [2, 96], strides = [1, 1]} : vector<16x96xf32> to vector<2x96xf32>
    %cst_60 = arith.constant dense<0.000000e+00> : vector<2x96xf32>
    %313 = tpu.matmul %311, %245, %cst_60 {dimension_numbers = #tpu.dot_dimension_numbers<[1], [0], [0], [1], [0, 0, 1, 1], [], []>} : vector<2x32xf32>, vector<32x96xf32>, vector<2x96xf32> -> vector<2x96xf32>
    %314 = arith.addf %313, %252 : vector<2x96xf32>
    %315 = vector.extract_strided_slice %312 {offsets = [0, 0], sizes = [2, 32], strides = [1, 1]} : vector<2x96xf32> to vector<2x32xf32>
    %316 = vector.extract_strided_slice %314 {offsets = [0, 0], sizes = [2, 32], strides = [1, 1]} : vector<2x96xf32> to vector<2x32xf32>
    %317 = arith.addf %315, %316 : vector<2x32xf32>
    %318 = arith.negf %317 : vector<2x32xf32>
    %319 = math.exp %318 : vector<2x32xf32>
    %cst_61 = arith.constant 1.000000e+00 : f32
    %320 = vector.broadcast %cst_61 : f32 to vector<2x32xf32>
    %321 = arith.addf %320, %319 : vector<2x32xf32>
    %322 = arith.divf %320, %321 : vector<2x32xf32>
    %323 = vector.extract_strided_slice %312 {offsets = [0, 32], sizes = [2, 32], strides = [1, 1]} : vector<2x96xf32> to vector<2x32xf32>
    %324 = vector.extract_strided_slice %314 {offsets = [0, 32], sizes = [2, 32], strides = [1, 1]} : vector<2x96xf32> to vector<2x32xf32>
    %325 = arith.addf %323, %324 : vector<2x32xf32>
    %326 = arith.negf %325 : vector<2x32xf32>
    %327 = math.exp %326 : vector<2x32xf32>
    %cst_62 = arith.constant 1.000000e+00 : f32
    %328 = vector.broadcast %cst_62 : f32 to vector<2x32xf32>
    %329 = arith.addf %328, %327 : vector<2x32xf32>
    %330 = arith.divf %328, %329 : vector<2x32xf32>
    %331 = vector.extract_strided_slice %312 {offsets = [0, 64], sizes = [2, 32], strides = [1, 1]} : vector<2x96xf32> to vector<2x32xf32>
    %332 = vector.extract_strided_slice %314 {offsets = [0, 64], sizes = [2, 32], strides = [1, 1]} : vector<2x96xf32> to vector<2x32xf32>
    %333 = arith.mulf %322, %332 : vector<2x32xf32>
    %334 = arith.addf %331, %333 : vector<2x32xf32>
    %335 = math.tanh %334 : vector<2x32xf32>
    %cst_63 = arith.constant 1.000000e+00 : f32
    %336 = vector.broadcast %cst_63 : f32 to vector<2x32xf32>
    %337 = arith.subf %336, %330 : vector<2x32xf32>
    %338 = arith.mulf %337, %335 : vector<2x32xf32>
    %339 = arith.mulf %330, %311 : vector<2x32xf32>
    %340 = arith.addf %338, %339 : vector<2x32xf32>
    %341 = vector.extract_strided_slice %250 {offsets = [6, 0], sizes = [2, 96], strides = [1, 1]} : vector<16x96xf32> to vector<2x96xf32>
    %cst_64 = arith.constant dense<0.000000e+00> : vector<2x96xf32>
    %342 = tpu.matmul %340, %245, %cst_64 {dimension_numbers = #tpu.dot_dimension_numbers<[1], [0], [0], [1], [0, 0, 1, 1], [], []>} : vector<2x32xf32>, vector<32x96xf32>, vector<2x96xf32> -> vector<2x96xf32>
    %343 = arith.addf %342, %252 : vector<2x96xf32>
    %344 = vector.extract_strided_slice %341 {offsets = [0, 0], sizes = [2, 32], strides = [1, 1]} : vector<2x96xf32> to vector<2x32xf32>
    %345 = vector.extract_strided_slice %343 {offsets = [0, 0], sizes = [2, 32], strides = [1, 1]} : vector<2x96xf32> to vector<2x32xf32>
    %346 = arith.addf %344, %345 : vector<2x32xf32>
    %347 = arith.negf %346 : vector<2x32xf32>
    %348 = math.exp %347 : vector<2x32xf32>
    %cst_65 = arith.constant 1.000000e+00 : f32
    %349 = vector.broadcast %cst_65 : f32 to vector<2x32xf32>
    %350 = arith.addf %349, %348 : vector<2x32xf32>
    %351 = arith.divf %349, %350 : vector<2x32xf32>
    %352 = vector.extract_strided_slice %341 {offsets = [0, 32], sizes = [2, 32], strides = [1, 1]} : vector<2x96xf32> to vector<2x32xf32>
    %353 = vector.extract_strided_slice %343 {offsets = [0, 32], sizes = [2, 32], strides = [1, 1]} : vector<2x96xf32> to vector<2x32xf32>
    %354 = arith.addf %352, %353 : vector<2x32xf32>
    %355 = arith.negf %354 : vector<2x32xf32>
    %356 = math.exp %355 : vector<2x32xf32>
    %cst_66 = arith.constant 1.000000e+00 : f32
    %357 = vector.broadcast %cst_66 : f32 to vector<2x32xf32>
    %358 = arith.addf %357, %356 : vector<2x32xf32>
    %359 = arith.divf %357, %358 : vector<2x32xf32>
    %360 = vector.extract_strided_slice %341 {offsets = [0, 64], sizes = [2, 32], strides = [1, 1]} : vector<2x96xf32> to vector<2x32xf32>
    %361 = vector.extract_strided_slice %343 {offsets = [0, 64], sizes = [2, 32], strides = [1, 1]} : vector<2x96xf32> to vector<2x32xf32>
    %362 = arith.mulf %351, %361 : vector<2x32xf32>
    %363 = arith.addf %360, %362 : vector<2x32xf32>
    %364 = math.tanh %363 : vector<2x32xf32>
    %cst_67 = arith.constant 1.000000e+00 : f32
    %365 = vector.broadcast %cst_67 : f32 to vector<2x32xf32>
    %366 = arith.subf %365, %359 : vector<2x32xf32>
    %367 = arith.mulf %366, %364 : vector<2x32xf32>
    %368 = arith.mulf %359, %340 : vector<2x32xf32>
    %369 = arith.addf %367, %368 : vector<2x32xf32>
    %370 = vector.extract_strided_slice %250 {offsets = [8, 0], sizes = [2, 96], strides = [1, 1]} : vector<16x96xf32> to vector<2x96xf32>
    %cst_68 = arith.constant dense<0.000000e+00> : vector<2x96xf32>
    %371 = tpu.matmul %369, %245, %cst_68 {dimension_numbers = #tpu.dot_dimension_numbers<[1], [0], [0], [1], [0, 0, 1, 1], [], []>} : vector<2x32xf32>, vector<32x96xf32>, vector<2x96xf32> -> vector<2x96xf32>
    %372 = arith.addf %371, %252 : vector<2x96xf32>
    %373 = vector.extract_strided_slice %370 {offsets = [0, 0], sizes = [2, 32], strides = [1, 1]} : vector<2x96xf32> to vector<2x32xf32>
    %374 = vector.extract_strided_slice %372 {offsets = [0, 0], sizes = [2, 32], strides = [1, 1]} : vector<2x96xf32> to vector<2x32xf32>
    %375 = arith.addf %373, %374 : vector<2x32xf32>
    %376 = arith.negf %375 : vector<2x32xf32>
    %377 = math.exp %376 : vector<2x32xf32>
    %cst_69 = arith.constant 1.000000e+00 : f32
    %378 = vector.broadcast %cst_69 : f32 to vector<2x32xf32>
    %379 = arith.addf %378, %377 : vector<2x32xf32>
    %380 = arith.divf %378, %379 : vector<2x32xf32>
    %381 = vector.extract_strided_slice %370 {offsets = [0, 32], sizes = [2, 32], strides = [1, 1]} : vector<2x96xf32> to vector<2x32xf32>
    %382 = vector.extract_strided_slice %372 {offsets = [0, 32], sizes = [2, 32], strides = [1, 1]} : vector<2x96xf32> to vector<2x32xf32>
    %383 = arith.addf %381, %382 : vector<2x32xf32>
    %384 = arith.negf %383 : vector<2x32xf32>
    %385 = math.exp %384 : vector<2x32xf32>
    %cst_70 = arith.constant 1.000000e+00 : f32
    %386 = vector.broadcast %cst_70 : f32 to vector<2x32xf32>
    %387 = arith.addf %386, %385 : vector<2x32xf32>
    %388 = arith.divf %386, %387 : vector<2x32xf32>
    %389 = vector.extract_strided_slice %370 {offsets = [0, 64], sizes = [2, 32], strides = [1, 1]} : vector<2x96xf32> to vector<2x32xf32>
    %390 = vector.extract_strided_slice %372 {offsets = [0, 64], sizes = [2, 32], strides = [1, 1]} : vector<2x96xf32> to vector<2x32xf32>
    %391 = arith.mulf %380, %390 : vector<2x32xf32>
    %392 = arith.addf %389, %391 : vector<2x32xf32>
    %393 = math.tanh %392 : vector<2x32xf32>
    %cst_71 = arith.constant 1.000000e+00 : f32
    %394 = vector.broadcast %cst_71 : f32 to vector<2x32xf32>
    %395 = arith.subf %394, %388 : vector<2x32xf32>
    %396 = arith.mulf %395, %393 : vector<2x32xf32>
    %397 = arith.mulf %388, %369 : vector<2x32xf32>
    %398 = arith.addf %396, %397 : vector<2x32xf32>
    %399 = vector.extract_strided_slice %250 {offsets = [10, 0], sizes = [2, 96], strides = [1, 1]} : vector<16x96xf32> to vector<2x96xf32>
    %cst_72 = arith.constant dense<0.000000e+00> : vector<2x96xf32>
    %400 = tpu.matmul %398, %245, %cst_72 {dimension_numbers = #tpu.dot_dimension_numbers<[1], [0], [0], [1], [0, 0, 1, 1], [], []>} : vector<2x32xf32>, vector<32x96xf32>, vector<2x96xf32> -> vector<2x96xf32>
    %401 = arith.addf %400, %252 : vector<2x96xf32>
    %402 = vector.extract_strided_slice %399 {offsets = [0, 0], sizes = [2, 32], strides = [1, 1]} : vector<2x96xf32> to vector<2x32xf32>
    %403 = vector.extract_strided_slice %401 {offsets = [0, 0], sizes = [2, 32], strides = [1, 1]} : vector<2x96xf32> to vector<2x32xf32>
    %404 = arith.addf %402, %403 : vector<2x32xf32>
    %405 = arith.negf %404 : vector<2x32xf32>
    %406 = math.exp %405 : vector<2x32xf32>
    %cst_73 = arith.constant 1.000000e+00 : f32
    %407 = vector.broadcast %cst_73 : f32 to vector<2x32xf32>
    %408 = arith.addf %407, %406 : vector<2x32xf32>
    %409 = arith.divf %407, %408 : vector<2x32xf32>
    %410 = vector.extract_strided_slice %399 {offsets = [0, 32], sizes = [2, 32], strides = [1, 1]} : vector<2x96xf32> to vector<2x32xf32>
    %411 = vector.extract_strided_slice %401 {offsets = [0, 32], sizes = [2, 32], strides = [1, 1]} : vector<2x96xf32> to vector<2x32xf32>
    %412 = arith.addf %410, %411 : vector<2x32xf32>
    %413 = arith.negf %412 : vector<2x32xf32>
    %414 = math.exp %413 : vector<2x32xf32>
    %cst_74 = arith.constant 1.000000e+00 : f32
    %415 = vector.broadcast %cst_74 : f32 to vector<2x32xf32>
    %416 = arith.addf %415, %414 : vector<2x32xf32>
    %417 = arith.divf %415, %416 : vector<2x32xf32>
    %418 = vector.extract_strided_slice %399 {offsets = [0, 64], sizes = [2, 32], strides = [1, 1]} : vector<2x96xf32> to vector<2x32xf32>
    %419 = vector.extract_strided_slice %401 {offsets = [0, 64], sizes = [2, 32], strides = [1, 1]} : vector<2x96xf32> to vector<2x32xf32>
    %420 = arith.mulf %409, %419 : vector<2x32xf32>
    %421 = arith.addf %418, %420 : vector<2x32xf32>
    %422 = math.tanh %421 : vector<2x32xf32>
    %cst_75 = arith.constant 1.000000e+00 : f32
    %423 = vector.broadcast %cst_75 : f32 to vector<2x32xf32>
    %424 = arith.subf %423, %417 : vector<2x32xf32>
    %425 = arith.mulf %424, %422 : vector<2x32xf32>
    %426 = arith.mulf %417, %398 : vector<2x32xf32>
    %427 = arith.addf %425, %426 : vector<2x32xf32>
    %428 = vector.extract_strided_slice %250 {offsets = [12, 0], sizes = [2, 96], strides = [1, 1]} : vector<16x96xf32> to vector<2x96xf32>
    %cst_76 = arith.constant dense<0.000000e+00> : vector<2x96xf32>
    %429 = tpu.matmul %427, %245, %cst_76 {dimension_numbers = #tpu.dot_dimension_numbers<[1], [0], [0], [1], [0, 0, 1, 1], [], []>} : vector<2x32xf32>, vector<32x96xf32>, vector<2x96xf32> -> vector<2x96xf32>
    %430 = arith.addf %429, %252 : vector<2x96xf32>
    %431 = vector.extract_strided_slice %428 {offsets = [0, 0], sizes = [2, 32], strides = [1, 1]} : vector<2x96xf32> to vector<2x32xf32>
    %432 = vector.extract_strided_slice %430 {offsets = [0, 0], sizes = [2, 32], strides = [1, 1]} : vector<2x96xf32> to vector<2x32xf32>
    %433 = arith.addf %431, %432 : vector<2x32xf32>
    %434 = arith.negf %433 : vector<2x32xf32>
    %435 = math.exp %434 : vector<2x32xf32>
    %cst_77 = arith.constant 1.000000e+00 : f32
    %436 = vector.broadcast %cst_77 : f32 to vector<2x32xf32>
    %437 = arith.addf %436, %435 : vector<2x32xf32>
    %438 = arith.divf %436, %437 : vector<2x32xf32>
    %439 = vector.extract_strided_slice %428 {offsets = [0, 32], sizes = [2, 32], strides = [1, 1]} : vector<2x96xf32> to vector<2x32xf32>
    %440 = vector.extract_strided_slice %430 {offsets = [0, 32], sizes = [2, 32], strides = [1, 1]} : vector<2x96xf32> to vector<2x32xf32>
    %441 = arith.addf %439, %440 : vector<2x32xf32>
    %442 = arith.negf %441 : vector<2x32xf32>
    %443 = math.exp %442 : vector<2x32xf32>
    %cst_78 = arith.constant 1.000000e+00 : f32
    %444 = vector.broadcast %cst_78 : f32 to vector<2x32xf32>
    %445 = arith.addf %444, %443 : vector<2x32xf32>
    %446 = arith.divf %444, %445 : vector<2x32xf32>
    %447 = vector.extract_strided_slice %428 {offsets = [0, 64], sizes = [2, 32], strides = [1, 1]} : vector<2x96xf32> to vector<2x32xf32>
    %448 = vector.extract_strided_slice %430 {offsets = [0, 64], sizes = [2, 32], strides = [1, 1]} : vector<2x96xf32> to vector<2x32xf32>
    %449 = arith.mulf %438, %448 : vector<2x32xf32>
    %450 = arith.addf %447, %449 : vector<2x32xf32>
    %451 = math.tanh %450 : vector<2x32xf32>
    %cst_79 = arith.constant 1.000000e+00 : f32
    %452 = vector.broadcast %cst_79 : f32 to vector<2x32xf32>
    %453 = arith.subf %452, %446 : vector<2x32xf32>
    %454 = arith.mulf %453, %451 : vector<2x32xf32>
    %455 = arith.mulf %446, %427 : vector<2x32xf32>
    %456 = arith.addf %454, %455 : vector<2x32xf32>
    %457 = vector.extract_strided_slice %250 {offsets = [14, 0], sizes = [2, 96], strides = [1, 1]} : vector<16x96xf32> to vector<2x96xf32>
    %cst_80 = arith.constant dense<0.000000e+00> : vector<2x96xf32>
    %458 = tpu.matmul %456, %245, %cst_80 {dimension_numbers = #tpu.dot_dimension_numbers<[1], [0], [0], [1], [0, 0, 1, 1], [], []>} : vector<2x32xf32>, vector<32x96xf32>, vector<2x96xf32> -> vector<2x96xf32>
    %459 = arith.addf %458, %252 : vector<2x96xf32>
    %460 = vector.extract_strided_slice %457 {offsets = [0, 0], sizes = [2, 32], strides = [1, 1]} : vector<2x96xf32> to vector<2x32xf32>
    %461 = vector.extract_strided_slice %459 {offsets = [0, 0], sizes = [2, 32], strides = [1, 1]} : vector<2x96xf32> to vector<2x32xf32>
    %462 = arith.addf %460, %461 : vector<2x32xf32>
    %463 = arith.negf %462 : vector<2x32xf32>
    %464 = math.exp %463 : vector<2x32xf32>
    %cst_81 = arith.constant 1.000000e+00 : f32
    %465 = vector.broadcast %cst_81 : f32 to vector<2x32xf32>
    %466 = arith.addf %465, %464 : vector<2x32xf32>
    %467 = arith.divf %465, %466 : vector<2x32xf32>
    %468 = vector.extract_strided_slice %457 {offsets = [0, 32], sizes = [2, 32], strides = [1, 1]} : vector<2x96xf32> to vector<2x32xf32>
    %469 = vector.extract_strided_slice %459 {offsets = [0, 32], sizes = [2, 32], strides = [1, 1]} : vector<2x96xf32> to vector<2x32xf32>
    %470 = arith.addf %468, %469 : vector<2x32xf32>
    %471 = arith.negf %470 : vector<2x32xf32>
    %472 = math.exp %471 : vector<2x32xf32>
    %cst_82 = arith.constant 1.000000e+00 : f32
    %473 = vector.broadcast %cst_82 : f32 to vector<2x32xf32>
    %474 = arith.addf %473, %472 : vector<2x32xf32>
    %475 = arith.divf %473, %474 : vector<2x32xf32>
    %476 = vector.extract_strided_slice %457 {offsets = [0, 64], sizes = [2, 32], strides = [1, 1]} : vector<2x96xf32> to vector<2x32xf32>
    %477 = vector.extract_strided_slice %459 {offsets = [0, 64], sizes = [2, 32], strides = [1, 1]} : vector<2x96xf32> to vector<2x32xf32>
    %478 = arith.mulf %467, %477 : vector<2x32xf32>
    %479 = arith.addf %476, %478 : vector<2x32xf32>
    %480 = math.tanh %479 : vector<2x32xf32>
    %cst_83 = arith.constant 1.000000e+00 : f32
    %481 = vector.broadcast %cst_83 : f32 to vector<2x32xf32>
    %482 = arith.subf %481, %475 : vector<2x32xf32>
    %483 = arith.mulf %482, %480 : vector<2x32xf32>
    %484 = arith.mulf %475, %456 : vector<2x32xf32>
    %485 = arith.addf %483, %484 : vector<2x32xf32>
    %486 = tpu.concatenate %282, %311, %340, %369, %398, %427, %456, %485 in 1 : vector<2x32xf32>, vector<2x32xf32>, vector<2x32xf32>, vector<2x32xf32>, vector<2x32xf32>, vector<2x32xf32>, vector<2x32xf32>, vector<2x32xf32> -> vector<2x256xf32>
    %c0_84 = arith.constant 0 : index
    %c0_85 = arith.constant 0 : index
    %487 = vector.load %arg9[%c0_84, %c0_85] : memref<2x256xf32, #tpu.memory_space<vmem>>, vector<2x256xf32>
    tpu.vector_store %arg9[%c0_84, %c0_85], %486 {strides = array<i32>} : memref<2x256xf32, #tpu.memory_space<vmem>>, vector<2x256xf32>,
    return
  }
}

</mosaic_0001>

<llo_original>
// kernel: tpu_custom_call.1
$region0: #{tpu_custom_call.1}
  #allocation0 [shape = 'u32[]', space=smem, size = 0x4, offset = 0x4, fixed_abs, tag = 'smem constant byte address 0x4 - core index']
  #allocation1 [shape = 'u32[144,128]{1,0:T(1,128)}', space=vmem, size = 0x12000, scoped, tag = 'internal scratch']
  %s0 = inlined_call_operand.vmem [shape: f32[16,4], index: 0, kind: input, shape index: {}]
  %s1 = inlined_call_operand.vmem [shape: f32[4,96], index: 1, kind: input, shape index: {}]
  %s2 = inlined_call_operand.hbm [shape: f32[32,96], index: 2, kind: input, shape index: {}]
  %s3 = inlined_call_operand.vmem [shape: f32[1,96], index: 3, kind: input, shape index: {}]
  %s4 = inlined_call_operand.vmem [shape: f32[1,96], index: 4, kind: input, shape index: {}]
  %s5 = inlined_call_operand.hbm [shape: f32[32,96], index: 5, kind: input, shape index: {}]
  %s6 = inlined_call_operand.hbm [shape: f32[32,96], index: 6, kind: input, shape index: {}]
  %s7 = inlined_call_operand.vmem [shape: f32[1,96], index: 7, kind: input, shape index: {}]
  %s8 = inlined_call_operand.vmem [shape: f32[1,96], index: 8, kind: input, shape index: {}]
  %s9 = inlined_call_operand.hbm [shape: f32[2,256], index: 9, kind: output, shape index: {}]
  %s10 = sld [smem:[#allocation0]]
  $region58: #{tpu_custom_call.1} parent=0
    _
  %s12 = ssub.s32 1, %s10
  %s13 = scalar_select 0, %s12, %s10
  $region1: #{tpu_custom_call.1} parent=0
    #allocation2 [shape = 'u8[16384]{0}', space=vmem, size = 0x4000, scoped, tag = 'input window, operand 2, single buffered']
    #allocation3 [shape = 's32[1]{0}', space=sflag, size = 0x4, scoped, tag = 'scoped memory for tpu_custom_call.1']
    #allocation4 [shape = 's32[1]{0}', space=sflag, size = 0x4, scoped, tag = 'scoped memory for tpu_custom_call.1']
    #allocation5 [shape = 'u8[16384]{0}', space=vmem, size = 0x4000, scoped, tag = 'input window, operand 5, single buffered']
    #allocation6 [shape = 's32[1]{0}', space=sflag, size = 0x4, scoped, tag = 'scoped memory for tpu_custom_call.1']
    #allocation7 [shape = 'u8[16384]{0}', space=vmem, size = 0x4000, scoped, tag = 'input window, operand 6, single buffered']
    #allocation8 [shape = 'u8[2048]{0}', space=vmem, size = 0x800, scoped, tag = 'output window, operand 0, single buffered']
    %14 = vsyncpa [#allocation3], 0
    %15 = vsyncpa [#allocation6], 0
    %16 = vsyncpa [#allocation4], 0
    // Predicated region
    $region2: #{tpu_custom_call.1} parent=1 // pred_check
      _
    $region3: #{tpu_custom_call.1} parent=1 // pred_check_branch
      %18 = sbr.rel (0) target = $region5
    $region4: #{tpu_custom_call.1} parent=1 // pred_region
      _
    $region5: #{tpu_custom_call.1} parent=1 // pred_fallthru
      _
    // Predicated region
    $region6: #{tpu_custom_call.1} parent=1 // pred_check
      _
    $region7: #{tpu_custom_call.1} parent=1 // pred_check_branch
      %20 = sbr.rel (0) target = $region9
    $region8: #{tpu_custom_call.1} parent=1 // pred_region
      _
    $region9: #{tpu_custom_call.1} parent=1 // pred_fallthru
      _
    // Predicated region
    $region10: #{tpu_custom_call.1} parent=1 // pred_check
      _
    $region11: #{tpu_custom_call.1} parent=1 // pred_check_branch
      %22 = sbr.rel (0) target = $region13
    $region12: #{tpu_custom_call.1} parent=1 // pred_region
      %s24 = ssub.s32 512, 512
      %25 = vsyncadd [#allocation3], %s24
      %s26 = sshll.u32 [#allocation2], 4
      %s27 = int_to_ptr.vmem [resolvable:$true] %s26
      %32 = dma.hbm_to_vmem [thread:$0]  %s2, 512, %s27, [#allocation3], 128, 128, 8
    $region13: #{tpu_custom_call.1} parent=1 // pred_fallthru
      _
    // Predicated region
    $region14: #{tpu_custom_call.1} parent=1 // pred_check
      _
    $region15: #{tpu_custom_call.1} parent=1 // pred_check_branch
      %34 = sbr.rel (0) target = $region17
    $region16: #{tpu_custom_call.1} parent=1 // pred_region
      _
    $region17: #{tpu_custom_call.1} parent=1 // pred_fallthru
      _
    // Predicated region
    $region18: #{tpu_custom_call.1} parent=1 // pred_check
      _
    $region19: #{tpu_custom_call.1} parent=1 // pred_check_branch
      %36 = sbr.rel (0) target = $region21
    $region20: #{tpu_custom_call.1} parent=1 // pred_region
      _
    $region21: #{tpu_custom_call.1} parent=1 // pred_fallthru
      _
    // Predicated region
    $region22: #{tpu_custom_call.1} parent=1 // pred_check
      _
    $region23: #{tpu_custom_call.1} parent=1 // pred_check_branch
      %38 = sbr.rel (0) target = $region25
    $region24: #{tpu_custom_call.1} parent=1 // pred_region
      %s40 = ssub.s32 512, 512
      %41 = vsyncadd [#allocation6], %s40
      %s42 = sshll.u32 [#allocation5], 4
      %s43 = int_to_ptr.vmem [resolvable:$true] %s42
      %48 = dma.hbm_to_vmem [thread:$0]  %s5, 512, %s43, [#allocation6], 128, 128, 8
    $region25: #{tpu_custom_call.1} parent=1 // pred_fallthru
      _
    // Predicated region
    $region26: #{tpu_custom_call.1} parent=1 // pred_check
      _
    $region27: #{tpu_custom_call.1} parent=1 // pred_check_branch
      %50 = sbr.rel (0) target = $region29
    $region28: #{tpu_custom_call.1} parent=1 // pred_region
      %s52 = ssub.s32 512, 512
      %53 = vsyncadd [#allocation6], %s52
      %s54 = sshll.u32 [#allocation7], 4
      %s55 = int_to_ptr.vmem [resolvable:$true] %s54
      %60 = dma.hbm_to_vmem [thread:$0]  %s6, 512, %s55, [#allocation6], 128, 128, 8
    $region29: #{tpu_custom_call.1} parent=1 // pred_fallthru
      _
    // Predicated region
    $region30: #{tpu_custom_call.1} parent=1 // pred_check
      _
    $region31: #{tpu_custom_call.1} parent=1 // pred_check_branch
      %62 = sbr.rel (0) target = $region33
    $region32: #{tpu_custom_call.1} parent=1 // pred_region
      _
    $region33: #{tpu_custom_call.1} parent=1 // pred_fallthru
      _
    // Predicated region
    $region34: #{tpu_custom_call.1} parent=1 // pred_check
      _
    $region35: #{tpu_custom_call.1} parent=1 // pred_check_branch
      %64 = sbr.rel (0) target = $region37
    $region36: #{tpu_custom_call.1} parent=1 // pred_region
      _
    $region37: #{tpu_custom_call.1} parent=1 // pred_fallthru
      _
    // Predicated region
    $region38: #{tpu_custom_call.1} parent=1 // pred_check
      _
    $region39: #{tpu_custom_call.1} parent=1 // pred_check_branch
      %66 = sbr.rel (0) target = $region41
    $region40: #{tpu_custom_call.1} parent=1 // pred_region
      %67 = dma.done [#allocation3], 512
    $region41: #{tpu_custom_call.1} parent=1 // pred_fallthru
      _
    // Predicated region
    $region42: #{tpu_custom_call.1} parent=1 // pred_check
      _
    $region43: #{tpu_custom_call.1} parent=1 // pred_check_branch
      %69 = sbr.rel (0) target = $region45
    $region44: #{tpu_custom_call.1} parent=1 // pred_region
      %70 = dma.done [#allocation6], 512
    $region45: #{tpu_custom_call.1} parent=1 // pred_fallthru
      _
    // Predicated region
    $region46: #{tpu_custom_call.1} parent=1 // pred_check
      _
    $region47: #{tpu_custom_call.1} parent=1 // pred_check_branch
      %72 = sbr.rel (0) target = $region49
    $region48: #{tpu_custom_call.1} parent=1 // pred_region
      %73 = dma.done [#allocation6], 512
    $region49: #{tpu_custom_call.1} parent=1 // pred_fallthru
      _
    %v74 = vld [vmem:[%s0] sm:$0xff]
    %v75 = vld [vmem:[%s0 + $0x8] sm:$0xff]
    %v76 = vld [vmem:[%s1] sm:$0xf]
    %v77 = vld [vmem:[#allocation2] sm:$0xff]
    %v78 = vld [vmem:[#allocation2 + $0x8] sm:$0xff]
    %v79 = vld [vmem:[#allocation2 + $0x10] sm:$0xff]
    %v80 = vld [vmem:[#allocation2 + $0x18] sm:$0xff]
    %v81 = vld [vmem:[%s3] sm:$0x1]
    %v82 = vld [vmem:[%s4] sm:$0x1]
    %v84 = vlaneseq
    %v85 = vshrl.u32 %v84, 7
    %v86 = vsub.s32 0, %v85
    %v87 = vrot.slane %v81, %v86
    %vm89 = vcmask 31744
    %v91 = vsel %vm89, %v74, 0
    %v94 = vsel %vm89, %v75, 0
    %vm96 = vcmask 1043456
    %v98 = vsel %vm96, %v76, 0
    %100 = vmatprep.subr.mxu0 0.0
    %101 = vmatpush1.msra.mxu0 0.0
    %102 = vmatprep.subr.mxu0 0.0
    %103 = vmatpush1.msra.mxu0 0.0
    %104 = vmatprep.subr.mxu0 0.0
    %105 = vmatpush1.msra.mxu0 0.0
    %106 = vmatprep.subr.mxu0 0.0
    %107 = vmatpush1.msra.mxu0 0.0
    %108 = vmatprep.subr.mxu0 0.0
    %109 = vmatpush1.msra.mxu0 0.0
    %110 = vmatprep.subr.mxu0 0.0
    %111 = vmatpush1.msra.mxu0 0.0
    %112 = vmatprep.subr.mxu0 0.0
    %113 = vmatpush1.msra.mxu0 0.0
    %114 = vmatprep.subr.mxu0 0.0
    %115 = vmatpush1.msra.mxu0 0.0
    %116 = vmatprep.subr.mxu0 0.0
    %117 = vmatpush1.msra.mxu0 0.0
    %118 = vmatprep.subr.mxu0 0.0
    %119 = vmatpush1.msra.mxu0 0.0
    %120 = vmatprep.subr.mxu0 0.0
    %121 = vmatpush1.msra.mxu0 0.0
    %122 = vmatprep.subr.mxu0 0.0
    %123 = vmatpush1.msra.mxu0 0.0
    %124 = vmatprep.subr.mxu0 0.0
    %125 = vmatpush1.msra.mxu0 0.0
    %126 = vmatprep.subr.mxu0 0.0
    %127 = vmatpush1.msra.mxu0 0.0
    %128 = vmatprep.subr.mxu0 0.0
    %129 = vmatpush1.msra.mxu0 0.0
    %130 = vmatprep.subr.mxu0 0.0
    %131 = vmatpush1.msra.mxu0 %v98
    %132 = vmatprep.subr.mxu0 0.0
    %133 = vmatpush2.msra.mxu0 0.0
    %134 = vmatprep.subr.mxu0 0.0
    %135 = vmatpush2.msra.mxu0 0.0
    %136 = vmatprep.subr.mxu0 0.0
    %137 = vmatpush2.msra.mxu0 0.0
    %138 = vmatprep.subr.mxu0 0.0
    %139 = vmatpush2.msra.mxu0 0.0
    %140 = vmatprep.subr.mxu0 0.0
    %141 = vmatpush2.msra.mxu0 0.0
    %142 = vmatprep.subr.mxu0 0.0
    %143 = vmatpush2.msra.mxu0 0.0
    %144 = vmatprep.subr.mxu0 0.0
    %145 = vmatpush2.msra.mxu0 0.0
    %146 = vmatprep.subr.mxu0 0.0
    %147 = vmatpush2.msra.mxu0 0.0
    %148 = vmatprep.subr.mxu0 0.0
    %149 = vmatpush2.msra.mxu0 0.0
    %150 = vmatprep.subr.mxu0 0.0
    %151 = vmatpush2.msra.mxu0 0.0
    %152 = vmatprep.subr.mxu0 0.0
    %153 = vmatpush2.msra.mxu0 0.0
    %154 = vmatprep.subr.mxu0 0.0
    %155 = vmatpush2.msra.mxu0 0.0
    %156 = vmatprep.subr.mxu0 0.0
    %157 = vmatpush2.msra.mxu0 0.0
    %158 = vmatprep.subr.mxu0 0.0
    %159 = vmatpush2.msra.mxu0 0.0
    %160 = vmatprep.subr.mxu0 0.0
    %161 = vmatpush2.msra.mxu0 0.0
    %162 = vmatprep.subr.mxu0 0.0
    %163 = vmatpush2.msra.mxu0 0.0
    %164 = vmatprep.mubr.f32.mxu0 0.0
    %165 = vmatmul.mubr.f32.gmra.mxu0 %v91
    %v166 = vpop.f32.mrf.mxu0
    %v167 = vadd.f32 %v87, %v166
    %v168 = vpop.f32.mrf.mxu0
    %169 = vmatprep.mubr.f32.mxu0 0.0
    %170 = vmatmul.mubr.f32.gmra.mxu0 %v94
    %v171 = vpop.f32.mrf.mxu0
    %v172 = vadd.f32 %v87, %v171
    %v173 = vpop.f32.mrf.mxu0
    %174 = vdwg.mxu0
    %v176 = vlaneseq
    %v177 = vshrl.u32 %v176, 7
    %v178 = vsub.s32 0, %v177
    %v179 = vrot.slane %v82, %v178
    %vm181 = vcmask 261120
    %v183 = vsel %vm181, 0.0, 0
    %185 = vmatprep.subr.mxu0 0.0
    %186 = vmatpush1.msra.mxu0 0.0
    %187 = vmatprep.subr.mxu0 0.0
    %188 = vmatpush1.msra.mxu0 0.0
    %189 = vmatprep.subr.mxu0 0.0
    %190 = vmatpush1.msra.mxu0 0.0
    %191 = vmatprep.subr.mxu0 0.0
    %192 = vmatpush1.msra.mxu0 0.0
    %193 = vmatprep.subr.mxu0 0.0
    %194 = vmatpush1.msra.mxu0 0.0
    %195 = vmatprep.subr.mxu0 0.0
    %196 = vmatpush1.msra.mxu0 0.0
    %197 = vmatprep.subr.mxu0 0.0
    %198 = vmatpush1.msra.mxu0 0.0
    %199 = vmatprep.subr.mxu0 0.0
    %200 = vmatpush1.msra.mxu0 0.0
    %201 = vmatprep.subr.mxu0 0.0
    %202 = vmatpush1.msra.mxu0 0.0
    %203 = vmatprep.subr.mxu0 0.0
    %204 = vmatpush1.msra.mxu0 0.0
    %205 = vmatprep.subr.mxu0 0.0
    %206 = vmatpush1.msra.mxu0 0.0
    %207 = vmatprep.subr.mxu0 0.0
    %208 = vmatpush1.msra.mxu0 0.0
    %209 = vmatprep.subr.mxu0 0.0
    %210 = vmatpush1.msra.mxu0 %v80
    %211 = vmatprep.subr.mxu0 0.0
    %212 = vmatpush1.msra.mxu0 %v79
    %213 = vmatprep.subr.mxu0 0.0
    %214 = vmatpush1.msra.mxu0 %v78
    %215 = vmatprep.subr.mxu0 0.0
    %216 = vmatpush1.msra.mxu0 %v77
    %217 = vmatprep.subr.mxu0 0.0
    %218 = vmatpush2.msra.mxu0 0.0
    %219 = vmatprep.subr.mxu0 0.0
    %220 = vmatpush2.msra.mxu0 0.0
    %221 = vmatprep.subr.mxu0 0.0
    %222 = vmatpush2.msra.mxu0 0.0
    %223 = vmatprep.subr.mxu0 0.0
    %224 = vmatpush2.msra.mxu0 0.0
    %225 = vmatprep.subr.mxu0 0.0
    %226 = vmatpush2.msra.mxu0 0.0
    %227 = vmatprep.subr.mxu0 0.0
    %228 = vmatpush2.msra.mxu0 0.0
    %229 = vmatprep.subr.mxu0 0.0
    %230 = vmatpush2.msra.mxu0 0.0
    %231 = vmatprep.subr.mxu0 0.0
    %232 = vmatpush2.msra.mxu0 0.0
    %233 = vmatprep.subr.mxu0 0.0
    %234 = vmatpush2.msra.mxu0 0.0
    %235 = vmatprep.subr.mxu0 0.0
    %236 = vmatpush2.msra.mxu0 0.0
    %237 = vmatprep.subr.mxu0 0.0
    %238 = vmatpush2.msra.mxu0 0.0
    %239 = vmatprep.subr.mxu0 0.0
    %240 = vmatpush2.msra.mxu0 0.0
    %241 = vmatprep.subr.mxu0 0.0
    %242 = vmatpush2.msra.mxu0 0.0
    %243 = vmatprep.subr.mxu0 0.0
    %244 = vmatpush2.msra.mxu0 0.0
    %245 = vmatprep.subr.mxu0 0.0
    %246 = vmatpush2.msra.mxu0 0.0
    %247 = vmatprep.subr.mxu0 0.0
    %248 = vmatpush2.msra.mxu0 0.0
    %249 = vmatprep.mubr.f32.mxu0 0.0
    %250 = vmatmul.mubr.f32.gmra.mxu0 %v183
    %v251 = vpop.f32.mrf.mxu0
    %v252 = vadd.f32 %v179, %v251
    %v253 = vpop.f32.mrf.mxu0
    %254 = vdwg.mxu0
    %v255 = vadd.f32 %v167, %v252
    %v256 = vxor.u32 %v255, 2147483648
    %v257 = vmul.f32 %v256, 1.442695
    %v258 = vpow.pop %v257
    %v259 = vadd.f32 %v258, 1.0
    %v260 = vrcp.pop %v259
    %v261 = vmul.f32 1.0, %v260
    %263 = vrot.lane.b32.xlu0 %v252, 64
    %v264 = vpop.permute.xlu0 %263
    %v266 = vmul.f32 %v261, %v264
    %268 = vrot.lane.b32.xlu0 %v266, 64
    %v269 = vpop.permute.xlu0 %268
    %v271 = vadd.f32 %v167, %v269
    %v272 = vtanh.pop %v271
    %v273 = vsub.f32 1.0, %v261
    %275 = vrot.lane.b32.xlu0 %v272, 96
    %v276 = vpop.permute.xlu0 %275
    %v278 = vmul.f32 %v273, %v276
    %v279 = vmul.f32 %v261, 0.0
    %v280 = vadd.f32 %v278, %v279
    %282 = vrot.lane.b32.xlu0 %v280, 96
    %v283 = vpop.permute.xlu0 %282
    %v284 = vsel %vm181, %v283, 0
    %286 = vmatprep.subr.mxu0 0.0
    %287 = vmatpush1.msra.mxu0 0.0
    %288 = vmatprep.subr.mxu0 0.0
    %289 = vmatpush1.msra.mxu0 0.0
    %290 = vmatprep.subr.mxu0 0.0
    %291 = vmatpush1.msra.mxu0 0.0
    %292 = vmatprep.subr.mxu0 0.0
    %293 = vmatpush1.msra.mxu0 0.0
    %294 = vmatprep.subr.mxu0 0.0
    %295 = vmatpush1.msra.mxu0 0.0
    %296 = vmatprep.subr.mxu0 0.0
    %297 = vmatpush1.msra.mxu0 0.0
    %298 = vmatprep.subr.mxu0 0.0
    %299 = vmatpush1.msra.mxu0 0.0
    %300 = vmatprep.subr.mxu0 0.0
    %301 = vmatpush1.msra.mxu0 0.0
    %302 = vmatprep.subr.mxu0 0.0
    %303 = vmatpush1.msra.mxu0 0.0
    %304 = vmatprep.subr.mxu0 0.0
    %305 = vmatpush1.msra.mxu0 0.0
    %306 = vmatprep.subr.mxu0 0.0
    %307 = vmatpush1.msra.mxu0 0.0
    %308 = vmatprep.subr.mxu0 0.0
    %309 = vmatpush1.msra.mxu0 0.0
    %310 = vmatprep.subr.mxu0 0.0
    %311 = vmatpush1.msra.mxu0 %v80
    %312 = vmatprep.subr.mxu0 0.0
    %313 = vmatpush1.msra.mxu0 %v79
    %314 = vmatprep.subr.mxu0 0.0
    %315 = vmatpush1.msra.mxu0 %v78
    %316 = vmatprep.subr.mxu0 0.0
    %317 = vmatpush1.msra.mxu0 %v77
    %318 = vmatprep.subr.mxu0 0.0
    %319 = vmatpush2.msra.mxu0 0.0
    %320 = vmatprep.subr.mxu0 0.0
    %321 = vmatpush2.msra.mxu0 0.0
    %322 = vmatprep.subr.mxu0 0.0
    %323 = vmatpush2.msra.mxu0 0.0
    %324 = vmatprep.subr.mxu0 0.0
    %325 = vmatpush2.msra.mxu0 0.0
    %326 = vmatprep.subr.mxu0 0.0
    %327 = vmatpush2.msra.mxu0 0.0
    %328 = vmatprep.subr.mxu0 0.0
    %329 = vmatpush2.msra.mxu0 0.0
    %330 = vmatprep.subr.mxu0 0.0
    %331 = vmatpush2.msra.mxu0 0.0
    %332 = vmatprep.subr.mxu0 0.0
    %333 = vmatpush2.msra.mxu0 0.0
    %334 = vmatprep.subr.mxu0 0.0
    %335 = vmatpush2.msra.mxu0 0.0
    %336 = vmatprep.subr.mxu0 0.0
    %337 = vmatpush2.msra.mxu0 0.0
    %338 = vmatprep.subr.mxu0 0.0
    %339 = vmatpush2.msra.mxu0 0.0
    %340 = vmatprep.subr.mxu0 0.0
    %341 = vmatpush2.msra.mxu0 0.0
    %342 = vmatprep.subr.mxu0 0.0
    %343 = vmatpush2.msra.mxu0 0.0
    %344 = vmatprep.subr.mxu0 0.0
    %345 = vmatpush2.msra.mxu0 0.0
    %346 = vmatprep.subr.mxu0 0.0
    %347 = vmatpush2.msra.mxu0 0.0
    %348 = vmatprep.subr.mxu0 0.0
    %349 = vmatpush2.msra.mxu0 0.0
    %350 = vmatprep.mubr.f32.mxu0 0.0
    %351 = vmatmul.mubr.f32.gmra.mxu0 %v284
    %v352 = vpop.f32.mrf.mxu0
    %v353 = vadd.f32 %v179, %v352
    %v354 = vpop.f32.mrf.mxu0
    %355 = vdwg.mxu0
    %v357 = vrot.slane %v353, 6
    %v359 = vadd.f32 %v167, %v357
    %v360 = vxor.u32 %v359, 2147483648
    %v361 = vmul.f32 %v360, 1.442695
    %v362 = vpow.pop %v361
    %v363 = vadd.f32 %v362, 1.0
    %v364 = vrcp.pop %v363
    %v365 = vmul.f32 1.0, %v364
    %366 = vrot.lane.b32.xlu0 %v357, 64
    %v367 = vpop.permute.xlu0 %366
    %v369 = vmul.f32 %v365, %v367
    %371 = vrot.lane.b32.xlu0 %v369, 64
    %v372 = vpop.permute.xlu0 %371
    %v374 = vadd.f32 %v167, %v372
    %v375 = vtanh.pop %v374
    %v376 = vsub.f32 1.0, %v365
    %378 = vrot.lane.b32.xlu0 %v375, 96
    %v379 = vpop.permute.xlu0 %378
    %v381 = vmul.f32 %v376, %v379
    %v382 = vrot.slane %v280, 6
    %v384 = vmul.f32 %v365, %v382
    %v385 = vadd.f32 %v381, %v384
    %v387 = vrot.slane %v385, 2
    %388 = vrot.lane.b32.xlu0 %v387, 96
    %v389 = vpop.permute.xlu0 %388
    %v390 = vsel %vm181, %v389, 0
    %392 = vmatprep.subr.mxu0 0.0
    %393 = vmatpush1.msra.mxu0 0.0
    %394 = vmatprep.subr.mxu0 0.0
    %395 = vmatpush1.msra.mxu0 0.0
    %396 = vmatprep.subr.mxu0 0.0
    %397 = vmatpush1.msra.mxu0 0.0
    %398 = vmatprep.subr.mxu0 0.0
    %399 = vmatpush1.msra.mxu0 0.0
    %400 = vmatprep.subr.mxu0 0.0
    %401 = vmatpush1.msra.mxu0 0.0
    %402 = vmatprep.subr.mxu0 0.0
    %403 = vmatpush1.msra.mxu0 0.0
    %404 = vmatprep.subr.mxu0 0.0
    %405 = vmatpush1.msra.mxu0 0.0
    %406 = vmatprep.subr.mxu0 0.0
    %407 = vmatpush1.msra.mxu0 0.0
    %408 = vmatprep.subr.mxu0 0.0
    %409 = vmatpush1.msra.mxu0 0.0
    %410 = vmatprep.subr.mxu0 0.0
    %411 = vmatpush1.msra.mxu0 0.0
    %412 = vmatprep.subr.mxu0 0.0
    %413 = vmatpush1.msra.mxu0 0.0
    %414 = vmatprep.subr.mxu0 0.0
    %415 = vmatpush1.msra.mxu0 0.0
    %416 = vmatprep.subr.mxu0 0.0
    %417 = vmatpush1.msra.mxu0 %v80
    %418 = vmatprep.subr.mxu0 0.0
    %419 = vmatpush1.msra.mxu0 %v79
    %420 = vmatprep.subr.mxu0 0.0
    %421 = vmatpush1.msra.mxu0 %v78
    %422 = vmatprep.subr.mxu0 0.0
    %423 = vmatpush1.msra.mxu0 %v77
    %424 = vmatprep.subr.mxu0 0.0
    %425 = vmatpush2.msra.mxu0 0.0
    %426 = vmatprep.subr.mxu0 0.0
    %427 = vmatpush2.msra.mxu0 0.0
    %428 = vmatprep.subr.mxu0 0.0
    %429 = vmatpush2.msra.mxu0 0.0
    %430 = vmatprep.subr.mxu0 0.0
    %431 = vmatpush2.msra.mxu0 0.0
    %432 = vmatprep.subr.mxu0 0.0
    %433 = vmatpush2.msra.mxu0 0.0
    %434 = vmatprep.subr.mxu0 0.0
    %435 = vmatpush2.msra.mxu0 0.0
    %436 = vmatprep.subr.mxu0 0.0
    %437 = vmatpush2.msra.mxu0 0.0
    %438 = vmatprep.subr.mxu0 0.0
    %439 = vmatpush2.msra.mxu0 0.0
    %440 = vmatprep.subr.mxu0 0.0
    %441 = vmatpush2.msra.mxu0 0.0
    %442 = vmatprep.subr.mxu0 0.0
    %443 = vmatpush2.msra.mxu0 0.0
    %444 = vmatprep.subr.mxu0 0.0
    %445 = vmatpush2.msra.mxu0 0.0
    %446 = vmatprep.subr.mxu0 0.0
    %447 = vmatpush2.msra.mxu0 0.0
    %448 = vmatprep.subr.mxu0 0.0
    %449 = vmatpush2.msra.mxu0 0.0
    %450 = vmatprep.subr.mxu0 0.0
    %451 = vmatpush2.msra.mxu0 0.0
    %452 = vmatprep.subr.mxu0 0.0
    %453 = vmatpush2.msra.mxu0 0.0
    %454 = vmatprep.subr.mxu0 0.0
    %455 = vmatpush2.msra.mxu0 0.0
    %456 = vmatprep.mubr.f32.mxu0 0.0
    %457 = vmatmul.mubr.f32.gmra.mxu0 %v390
    %v458 = vpop.f32.mrf.mxu0
    %v459 = vadd.f32 %v179, %v458
    %v460 = vpop.f32.mrf.mxu0
    %461 = vdwg.mxu0
    %v463 = vrot.slane %v459, 4
    %v465 = vadd.f32 %v167, %v463
    %v466 = vxor.u32 %v465, 2147483648
    %v467 = vmul.f32 %v466, 1.442695
    %v468 = vpow.pop %v467
    %v469 = vadd.f32 %v468, 1.0
    %v470 = vrcp.pop %v469
    %v471 = vmul.f32 1.0, %v470
    %472 = vrot.lane.b32.xlu0 %v463, 64
    %v473 = vpop.permute.xlu0 %472
    %v475 = vmul.f32 %v471, %v473
    %477 = vrot.lane.b32.xlu0 %v475, 64
    %v478 = vpop.permute.xlu0 %477
    %v480 = vadd.f32 %v167, %v478
    %v481 = vtanh.pop %v480
    %v482 = vsub.f32 1.0, %v471
    %484 = vrot.lane.b32.xlu0 %v481, 96
    %v485 = vpop.permute.xlu0 %484
    %v487 = vmul.f32 %v482, %v485
    %v488 = vrot.slane %v385, 6
    %v490 = vmul.f32 %v471, %v488
    %v491 = vadd.f32 %v487, %v490
    %v493 = vrot.slane %v491, 4
    %494 = vrot.lane.b32.xlu0 %v493, 96
    %v495 = vpop.permute.xlu0 %494
    %v496 = vsel %vm181, %v495, 0
    %498 = vmatprep.subr.mxu0 0.0
    %499 = vmatpush1.msra.mxu0 0.0
    %500 = vmatprep.subr.mxu0 0.0
    %501 = vmatpush1.msra.mxu0 0.0
    %502 = vmatprep.subr.mxu0 0.0
    %503 = vmatpush1.msra.mxu0 0.0
    %504 = vmatprep.subr.mxu0 0.0
    %505 = vmatpush1.msra.mxu0 0.0
    %506 = vmatprep.subr.mxu0 0.0
    %507 = vmatpush1.msra.mxu0 0.0
    %508 = vmatprep.subr.mxu0 0.0
    %509 = vmatpush1.msra.mxu0 0.0
    %510 = vmatprep.subr.mxu0 0.0
    %511 = vmatpush1.msra.mxu0 0.0
    %512 = vmatprep.subr.mxu0 0.0
    %513 = vmatpush1.msra.mxu0 0.0
    %514 = vmatprep.subr.mxu0 0.0
    %515 = vmatpush1.msra.mxu0 0.0
    %516 = vmatprep.subr.mxu0 0.0
    %517 = vmatpush1.msra.mxu0 0.0
    %518 = vmatprep.subr.mxu0 0.0
    %519 = vmatpush1.msra.mxu0 0.0
    %520 = vmatprep.subr.mxu0 0.0
    %521 = vmatpush1.msra.mxu0 0.0
    %522 = vmatprep.subr.mxu0 0.0
    %523 = vmatpush1.msra.mxu0 %v80
    %524 = vmatprep.subr.mxu0 0.0
    %525 = vmatpush1.msra.mxu0 %v79
    %526 = vmatprep.subr.mxu0 0.0
    %527 = vmatpush1.msra.mxu0 %v78
    %528 = vmatprep.subr.mxu0 0.0
    %529 = vmatpush1.msra.mxu0 %v77
    %530 = vmatprep.subr.mxu0 0.0
    %531 = vmatpush2.msra.mxu0 0.0
    %532 = vmatprep.subr.mxu0 0.0
    %533 = vmatpush2.msra.mxu0 0.0
    %534 = vmatprep.subr.mxu0 0.0
    %535 = vmatpush2.msra.mxu0 0.0
    %536 = vmatprep.subr.mxu0 0.0
    %537 = vmatpush2.msra.mxu0 0.0
    %538 = vmatprep.subr.mxu0 0.0
    %539 = vmatpush2.msra.mxu0 0.0
    %540 = vmatprep.subr.mxu0 0.0
    %541 = vmatpush2.msra.mxu0 0.0
    %542 = vmatprep.subr.mxu0 0.0
    %543 = vmatpush2.msra.mxu0 0.0
    %544 = vmatprep.subr.mxu0 0.0
    %545 = vmatpush2.msra.mxu0 0.0
    %546 = vmatprep.subr.mxu0 0.0
    %547 = vmatpush2.msra.mxu0 0.0
    %548 = vmatprep.subr.mxu0 0.0
    %549 = vmatpush2.msra.mxu0 0.0
    %550 = vmatprep.subr.mxu0 0.0
    %551 = vmatpush2.msra.mxu0 0.0
    %552 = vmatprep.subr.mxu0 0.0
    %553 = vmatpush2.msra.mxu0 0.0
    %554 = vmatprep.subr.mxu0 0.0
    %555 = vmatpush2.msra.mxu0 0.0
    %556 = vmatprep.subr.mxu0 0.0
    %557 = vmatpush2.msra.mxu0 0.0
    %558 = vmatprep.subr.mxu0 0.0
    %559 = vmatpush2.msra.mxu0 0.0
    %560 = vmatprep.subr.mxu0 0.0
    %561 = vmatpush2.msra.mxu0 0.0
    %562 = vmatprep.mubr.f32.mxu0 0.0
    %563 = vmatmul.mubr.f32.gmra.mxu0 %v496
    %v564 = vpop.f32.mrf.mxu0
    %v565 = vadd.f32 %v179, %v564
    %v566 = vpop.f32.mrf.mxu0
    %567 = vdwg.mxu0
    %v569 = vrot.slane %v565, 2
    %v571 = vadd.f32 %v167, %v569
    %v572 = vxor.u32 %v571, 2147483648
    %v573 = vmul.f32 %v572, 1.442695
    %v574 = vpow.pop %v573
    %v575 = vadd.f32 %v574, 1.0
    %v576 = vrcp.pop %v575
    %v577 = vmul.f32 1.0, %v576
    %578 = vrot.lane.b32.xlu0 %v569, 64
    %v579 = vpop.permute.xlu0 %578
    %v581 = vmul.f32 %v577, %v579
    %583 = vrot.lane.b32.xlu0 %v581, 64
    %v584 = vpop.permute.xlu0 %583
    %v586 = vadd.f32 %v167, %v584
    %v587 = vtanh.pop %v586
    %v588 = vsub.f32 1.0, %v577
    %590 = vrot.lane.b32.xlu0 %v587, 96
    %v591 = vpop.permute.xlu0 %590
    %v593 = vmul.f32 %v588, %v591
    %v594 = vrot.slane %v491, 6
    %v596 = vmul.f32 %v577, %v594
    %v597 = vadd.f32 %v593, %v596
    %v599 = vrot.slane %v597, 6
    %600 = vrot.lane.b32.xlu0 %v599, 96
    %v601 = vpop.permute.xlu0 %600
    %v602 = vsel %vm181, %v601, 0
    %604 = vmatprep.subr.mxu0 0.0
    %605 = vmatpush1.msra.mxu0 0.0
    %606 = vmatprep.subr.mxu0 0.0
    %607 = vmatpush1.msra.mxu0 0.0
    %608 = vmatprep.subr.mxu0 0.0
    %609 = vmatpush1.msra.mxu0 0.0
    %610 = vmatprep.subr.mxu0 0.0
    %611 = vmatpush1.msra.mxu0 0.0
    %612 = vmatprep.subr.mxu0 0.0
    %613 = vmatpush1.msra.mxu0 0.0
    %614 = vmatprep.subr.mxu0 0.0
    %615 = vmatpush1.msra.mxu0 0.0
    %616 = vmatprep.subr.mxu0 0.0
    %617 = vmatpush1.msra.mxu0 0.0
    %618 = vmatprep.subr.mxu0 0.0
    %619 = vmatpush1.msra.mxu0 0.0
    %620 = vmatprep.subr.mxu0 0.0
    %621 = vmatpush1.msra.mxu0 0.0
    %622 = vmatprep.subr.mxu0 0.0
    %623 = vmatpush1.msra.mxu0 0.0
    %624 = vmatprep.subr.mxu0 0.0
    %625 = vmatpush1.msra.mxu0 0.0
    %626 = vmatprep.subr.mxu0 0.0
    %627 = vmatpush1.msra.mxu0 0.0
    %628 = vmatprep.subr.mxu0 0.0
    %629 = vmatpush1.msra.mxu0 %v80
    %630 = vmatprep.subr.mxu0 0.0
    %631 = vmatpush1.msra.mxu0 %v79
    %632 = vmatprep.subr.mxu0 0.0
    %633 = vmatpush1.msra.mxu0 %v78
    %634 = vmatprep.subr.mxu0 0.0
    %635 = vmatpush1.msra.mxu0 %v77
    %636 = vmatprep.subr.mxu0 0.0
    %637 = vmatpush2.msra.mxu0 0.0
    %638 = vmatprep.subr.mxu0 0.0
    %639 = vmatpush2.msra.mxu0 0.0
    %640 = vmatprep.subr.mxu0 0.0
    %641 = vmatpush2.msra.mxu0 0.0
    %642 = vmatprep.subr.mxu0 0.0
    %643 = vmatpush2.msra.mxu0 0.0
    %644 = vmatprep.subr.mxu0 0.0
    %645 = vmatpush2.msra.mxu0 0.0
    %646 = vmatprep.subr.mxu0 0.0
    %647 = vmatpush2.msra.mxu0 0.0
    %648 = vmatprep.subr.mxu0 0.0
    %649 = vmatpush2.msra.mxu0 0.0
    %650 = vmatprep.subr.mxu0 0.0
    %651 = vmatpush2.msra.mxu0 0.0
    %652 = vmatprep.subr.mxu0 0.0
    %653 = vmatpush2.msra.mxu0 0.0
    %654 = vmatprep.subr.mxu0 0.0
    %655 = vmatpush2.msra.mxu0 0.0
    %656 = vmatprep.subr.mxu0 0.0
    %657 = vmatpush2.msra.mxu0 0.0
    %658 = vmatprep.subr.mxu0 0.0
    %659 = vmatpush2.msra.mxu0 0.0
    %660 = vmatprep.subr.mxu0 0.0
    %661 = vmatpush2.msra.mxu0 0.0
    %662 = vmatprep.subr.mxu0 0.0
    %663 = vmatpush2.msra.mxu0 0.0
    %664 = vmatprep.subr.mxu0 0.0
    %665 = vmatpush2.msra.mxu0 0.0
    %666 = vmatprep.subr.mxu0 0.0
    %667 = vmatpush2.msra.mxu0 0.0
    %668 = vmatprep.mubr.f32.mxu0 0.0
    %669 = vmatmul.mubr.f32.gmra.mxu0 %v602
    %v670 = vpop.f32.mrf.mxu0
    %v671 = vadd.f32 %v179, %v670
    %v672 = vpop.f32.mrf.mxu0
    %673 = vdwg.mxu0
    %v674 = vadd.f32 %v172, %v671
    %v675 = vxor.u32 %v674, 2147483648
    %v676 = vmul.f32 %v675, 1.442695
    %v677 = vpow.pop %v676
    %v678 = vadd.f32 %v677, 1.0
    %v679 = vrcp.pop %v678
    %v680 = vmul.f32 1.0, %v679
    %682 = vrot.lane.b32.xlu0 %v671, 64
    %v683 = vpop.permute.xlu0 %682
    %v685 = vmul.f32 %v680, %v683
    %687 = vrot.lane.b32.xlu0 %v685, 64
    %v688 = vpop.permute.xlu0 %687
    %v690 = vadd.f32 %v172, %v688
    %v691 = vtanh.pop %v690
    %v692 = vsub.f32 1.0, %v680
    %694 = vrot.lane.b32.xlu0 %v691, 96
    %v695 = vpop.permute.xlu0 %694
    %v697 = vmul.f32 %v692, %v695
    %v699 = vmul.f32 %v680, %v599
    %v700 = vadd.f32 %v697, %v699
    %702 = vrot.lane.b32.xlu0 %v700, 96
    %v703 = vpop.permute.xlu0 %702
    %v704 = vsel %vm181, %v703, 0
    %706 = vmatprep.subr.mxu0 0.0
    %707 = vmatpush1.msra.mxu0 0.0
    %708 = vmatprep.subr.mxu0 0.0
    %709 = vmatpush1.msra.mxu0 0.0
    %710 = vmatprep.subr.mxu0 0.0
    %711 = vmatpush1.msra.mxu0 0.0
    %712 = vmatprep.subr.mxu0 0.0
    %713 = vmatpush1.msra.mxu0 0.0
    %714 = vmatprep.subr.mxu0 0.0
    %715 = vmatpush1.msra.mxu0 0.0
    %716 = vmatprep.subr.mxu0 0.0
    %717 = vmatpush1.msra.mxu0 0.0
    %718 = vmatprep.subr.mxu0 0.0
    %719 = vmatpush1.msra.mxu0 0.0
    %720 = vmatprep.subr.mxu0 0.0
    %721 = vmatpush1.msra.mxu0 0.0
    %722 = vmatprep.subr.mxu0 0.0
    %723 = vmatpush1.msra.mxu0 0.0
    %724 = vmatprep.subr.mxu0 0.0
    %725 = vmatpush1.msra.mxu0 0.0
    %726 = vmatprep.subr.mxu0 0.0
    %727 = vmatpush1.msra.mxu0 0.0
    %728 = vmatprep.subr.mxu0 0.0
    %729 = vmatpush1.msra.mxu0 0.0
    %730 = vmatprep.subr.mxu0 0.0
    %731 = vmatpush1.msra.mxu0 %v80
    %732 = vmatprep.subr.mxu0 0.0
    %733 = vmatpush1.msra.mxu0 %v79
    %734 = vmatprep.subr.mxu0 0.0
    %735 = vmatpush1.msra.mxu0 %v78
    %736 = vmatprep.subr.mxu0 0.0
    %737 = vmatpush1.msra.mxu0 %v77
    %738 = vmatprep.subr.mxu0 0.0
    %739 = vmatpush2.msra.mxu0 0.0
    %740 = vmatprep.subr.mxu0 0.0
    %741 = vmatpush2.msra.mxu0 0.0
    %742 = vmatprep.subr.mxu0 0.0
    %743 = vmatpush2.msra.mxu0 0.0
    %744 = vmatprep.subr.mxu0 0.0
    %745 = vmatpush2.msra.mxu0 0.0
    %746 = vmatprep.subr.mxu0 0.0
    %747 = vmatpush2.msra.mxu0 0.0
    %748 = vmatprep.subr.mxu0 0.0
    %749 = vmatpush2.msra.mxu0 0.0
    %750 = vmatprep.subr.mxu0 0.0
    %751 = vmatpush2.msra.mxu0 0.0
    %752 = vmatprep.subr.mxu0 0.0
    %753 = vmatpush2.msra.mxu0 0.0
    %754 = vmatprep.subr.mxu0 0.0
    %755 = vmatpush2.msra.mxu0 0.0
    %756 = vmatprep.subr.mxu0 0.0
    %757 = vmatpush2.msra.mxu0 0.0
    %758 = vmatprep.subr.mxu0 0.0
    %759 = vmatpush2.msra.mxu0 0.0
    %760 = vmatprep.subr.mxu0 0.0
    %761 = vmatpush2.msra.mxu0 0.0
    %762 = vmatprep.subr.mxu0 0.0
    %763 = vmatpush2.msra.mxu0 0.0
    %764 = vmatprep.subr.mxu0 0.0
    %765 = vmatpush2.msra.mxu0 0.0
    %766 = vmatprep.subr.mxu0 0.0
    %767 = vmatpush2.msra.mxu0 0.0
    %768 = vmatprep.subr.mxu0 0.0
    %769 = vmatpush2.msra.mxu0 0.0
    %770 = vmatprep.mubr.f32.mxu0 0.0
    %771 = vmatmul.mubr.f32.gmra.mxu0 %v704
    %v772 = vpop.f32.mrf.mxu0
    %v773 = vadd.f32 %v179, %v772
    %v774 = vpop.f32.mrf.mxu0
    %775 = vdwg.mxu0
    %v777 = vrot.slane %v773, 6
    %v779 = vadd.f32 %v172, %v777
    %v780 = vxor.u32 %v779, 2147483648
    %v781 = vmul.f32 %v780, 1.442695
    %v782 = vpow.pop %v781
    %v783 = vadd.f32 %v782, 1.0
    %v784 = vrcp.pop %v783
    %v785 = vmul.f32 1.0, %v784
    %786 = vrot.lane.b32.xlu0 %v777, 64
    %v787 = vpop.permute.xlu0 %786
    %v789 = vmul.f32 %v785, %v787
    %791 = vrot.lane.b32.xlu0 %v789, 64
    %v792 = vpop.permute.xlu0 %791
    %v794 = vadd.f32 %v172, %v792
    %v795 = vtanh.pop %v794
    %v796 = vsub.f32 1.0, %v785
    %798 = vrot.lane.b32.xlu0 %v795, 96
    %v799 = vpop.permute.xlu0 %798
    %v801 = vmul.f32 %v796, %v799
    %v802 = vrot.slane %v700, 6
    %v804 = vmul.f32 %v785, %v802
    %v805 = vadd.f32 %v801, %v804
    %v807 = vrot.slane %v805, 2
    %808 = vrot.lane.b32.xlu0 %v807, 96
    %v809 = vpop.permute.xlu0 %808
    %v810 = vsel %vm181, %v809, 0
    %812 = vmatprep.subr.mxu0 0.0
    %813 = vmatpush1.msra.mxu0 0.0
    %814 = vmatprep.subr.mxu0 0.0
    %815 = vmatpush1.msra.mxu0 0.0
    %816 = vmatprep.subr.mxu0 0.0
    %817 = vmatpush1.msra.mxu0 0.0
    %818 = vmatprep.subr.mxu0 0.0
    %819 = vmatpush1.msra.mxu0 0.0
    %820 = vmatprep.subr.mxu0 0.0
    %821 = vmatpush1.msra.mxu0 0.0
    %822 = vmatprep.subr.mxu0 0.0
    %823 = vmatpush1.msra.mxu0 0.0
    %824 = vmatprep.subr.mxu0 0.0
    %825 = vmatpush1.msra.mxu0 0.0
    %826 = vmatprep.subr.mxu0 0.0
    %827 = vmatpush1.msra.mxu0 0.0
    %828 = vmatprep.subr.mxu0 0.0
    %829 = vmatpush1.msra.mxu0 0.0
    %830 = vmatprep.subr.mxu0 0.0
    %831 = vmatpush1.msra.mxu0 0.0
    %832 = vmatprep.subr.mxu0 0.0
    %833 = vmatpush1.msra.mxu0 0.0
    %834 = vmatprep.subr.mxu0 0.0
    %835 = vmatpush1.msra.mxu0 0.0
    %836 = vmatprep.subr.mxu0 0.0
    %837 = vmatpush1.msra.mxu0 %v80
    %838 = vmatprep.subr.mxu0 0.0
    %839 = vmatpush1.msra.mxu0 %v79
    %840 = vmatprep.subr.mxu0 0.0
    %841 = vmatpush1.msra.mxu0 %v78
    %842 = vmatprep.subr.mxu0 0.0
    %843 = vmatpush1.msra.mxu0 %v77
    %844 = vmatprep.subr.mxu0 0.0
    %845 = vmatpush2.msra.mxu0 0.0
    %846 = vmatprep.subr.mxu0 0.0
    %847 = vmatpush2.msra.mxu0 0.0
    %848 = vmatprep.subr.mxu0 0.0
    %849 = vmatpush2.msra.mxu0 0.0
    %850 = vmatprep.subr.mxu0 0.0
    %851 = vmatpush2.msra.mxu0 0.0
    %852 = vmatprep.subr.mxu0 0.0
    %853 = vmatpush2.msra.mxu0 0.0
    %854 = vmatprep.subr.mxu0 0.0
    %855 = vmatpush2.msra.mxu0 0.0
    %856 = vmatprep.subr.mxu0 0.0
    %857 = vmatpush2.msra.mxu0 0.0
    %858 = vmatprep.subr.mxu0 0.0
    %859 = vmatpush2.msra.mxu0 0.0
    %860 = vmatprep.subr.mxu0 0.0
    %861 = vmatpush2.msra.mxu0 0.0
    %862 = vmatprep.subr.mxu0 0.0
    %863 = vmatpush2.msra.mxu0 0.0
    %864 = vmatprep.subr.mxu0 0.0
    %865 = vmatpush2.msra.mxu0 0.0
    %866 = vmatprep.subr.mxu0 0.0
    %867 = vmatpush2.msra.mxu0 0.0
    %868 = vmatprep.subr.mxu0 0.0
    %869 = vmatpush2.msra.mxu0 0.0
    %870 = vmatprep.subr.mxu0 0.0
    %871 = vmatpush2.msra.mxu0 0.0
    %872 = vmatprep.subr.mxu0 0.0
    %873 = vmatpush2.msra.mxu0 0.0
    %874 = vmatprep.subr.mxu0 0.0
    %875 = vmatpush2.msra.mxu0 0.0
    %876 = vmatprep.mubr.f32.mxu0 0.0
    %877 = vmatmul.mubr.f32.gmra.mxu0 %v810
    %v878 = vpop.f32.mrf.mxu0
    %v879 = vadd.f32 %v179, %v878
    %v880 = vpop.f32.mrf.mxu0
    %881 = vdwg.mxu0
    %v883 = vrot.slane %v879, 4
    %v885 = vadd.f32 %v172, %v883
    %v886 = vxor.u32 %v885, 2147483648
    %v887 = vmul.f32 %v886, 1.442695
    %v888 = vpow.pop %v887
    %v889 = vadd.f32 %v888, 1.0
    %v890 = vrcp.pop %v889
    %v891 = vmul.f32 1.0, %v890
    %892 = vrot.lane.b32.xlu0 %v883, 64
    %v893 = vpop.permute.xlu0 %892
    %v895 = vmul.f32 %v891, %v893
    %897 = vrot.lane.b32.xlu0 %v895, 64
    %v898 = vpop.permute.xlu0 %897
    %v900 = vadd.f32 %v172, %v898
    %v901 = vtanh.pop %v900
    %v902 = vsub.f32 1.0, %v891
    %904 = vrot.lane.b32.xlu0 %v901, 96
    %v905 = vpop.permute.xlu0 %904
    %v907 = vmul.f32 %v902, %v905
    %v908 = vrot.slane %v805, 6
    %v910 = vmul.f32 %v891, %v908
    %v911 = vadd.f32 %v907, %v910
    %v913 = vrot.slane %v911, 4
    %914 = vrot.lane.b32.xlu0 %v913, 96
    %v915 = vpop.permute.xlu0 %914
    %v916 = vsel %vm181, %v915, 0
    %918 = vmatprep.subr.mxu0 0.0
    %919 = vmatpush1.msra.mxu0 0.0
    %920 = vmatprep.subr.mxu0 0.0
    %921 = vmatpush1.msra.mxu0 0.0
    %922 = vmatprep.subr.mxu0 0.0
    %923 = vmatpush1.msra.mxu0 0.0
    %924 = vmatprep.subr.mxu0 0.0
    %925 = vmatpush1.msra.mxu0 0.0
    %926 = vmatprep.subr.mxu0 0.0
    %927 = vmatpush1.msra.mxu0 0.0
    %928 = vmatprep.subr.mxu0 0.0
    %929 = vmatpush1.msra.mxu0 0.0
    %930 = vmatprep.subr.mxu0 0.0
    %931 = vmatpush1.msra.mxu0 0.0
    %932 = vmatprep.subr.mxu0 0.0
    %933 = vmatpush1.msra.mxu0 0.0
    %934 = vmatprep.subr.mxu0 0.0
    %935 = vmatpush1.msra.mxu0 0.0
    %936 = vmatprep.subr.mxu0 0.0
    %937 = vmatpush1.msra.mxu0 0.0
    %938 = vmatprep.subr.mxu0 0.0
    %939 = vmatpush1.msra.mxu0 0.0
    %940 = vmatprep.subr.mxu0 0.0
    %941 = vmatpush1.msra.mxu0 0.0
    %942 = vmatprep.subr.mxu0 0.0
    %943 = vmatpush1.msra.mxu0 %v80
    %944 = vmatprep.subr.mxu0 0.0
    %945 = vmatpush1.msra.mxu0 %v79
    %946 = vmatprep.subr.mxu0 0.0
    %947 = vmatpush1.msra.mxu0 %v78
    %948 = vmatprep.subr.mxu0 0.0
    %949 = vmatpush1.msra.mxu0 %v77
    %950 = vmatprep.subr.mxu0 0.0
    %951 = vmatpush2.msra.mxu0 0.0
    %952 = vmatprep.subr.mxu0 0.0
    %953 = vmatpush2.msra.mxu0 0.0
    %954 = vmatprep.subr.mxu0 0.0
    %955 = vmatpush2.msra.mxu0 0.0
    %956 = vmatprep.subr.mxu0 0.0
    %957 = vmatpush2.msra.mxu0 0.0
    %958 = vmatprep.subr.mxu0 0.0
    %959 = vmatpush2.msra.mxu0 0.0
    %960 = vmatprep.subr.mxu0 0.0
    %961 = vmatpush2.msra.mxu0 0.0
    %962 = vmatprep.subr.mxu0 0.0
    %963 = vmatpush2.msra.mxu0 0.0
    %964 = vmatprep.subr.mxu0 0.0
    %965 = vmatpush2.msra.mxu0 0.0
    %966 = vmatprep.subr.mxu0 0.0
    %967 = vmatpush2.msra.mxu0 0.0
    %968 = vmatprep.subr.mxu0 0.0
    %969 = vmatpush2.msra.mxu0 0.0
    %970 = vmatprep.subr.mxu0 0.0
    %971 = vmatpush2.msra.mxu0 0.0
    %972 = vmatprep.subr.mxu0 0.0
    %973 = vmatpush2.msra.mxu0 0.0
    %974 = vmatprep.subr.mxu0 0.0
    %975 = vmatpush2.msra.mxu0 0.0
    %976 = vmatprep.subr.mxu0 0.0
    %977 = vmatpush2.msra.mxu0 0.0
    %978 = vmatprep.subr.mxu0 0.0
    %979 = vmatpush2.msra.mxu0 0.0
    %980 = vmatprep.subr.mxu0 0.0
    %981 = vmatpush2.msra.mxu0 0.0
    %982 = vmatprep.mubr.f32.mxu0 0.0
    %983 = vmatmul.mubr.f32.gmra.mxu0 %v916
    %v984 = vpop.f32.mrf.mxu0
    %v985 = vadd.f32 %v179, %v984
    %v986 = vpop.f32.mrf.mxu0
    %987 = vdwg.mxu0
    %v989 = vrot.slane %v985, 2
    %v991 = vadd.f32 %v172, %v989
    %v992 = vxor.u32 %v991, 2147483648
    %v993 = vmul.f32 %v992, 1.442695
    %v994 = vpow.pop %v993
    %v995 = vadd.f32 %v994, 1.0
    %v996 = vrcp.pop %v995
    %v997 = vmul.f32 1.0, %v996
    %998 = vrot.lane.b32.xlu0 %v989, 64
    %v999 = vpop.permute.xlu0 %998
    %v1001 = vmul.f32 %v997, %v999
    %1003 = vrot.lane.b32.xlu0 %v1001, 64
    %v1004 = vpop.permute.xlu0 %1003
    %v1006 = vadd.f32 %v172, %v1004
    %v1007 = vtanh.pop %v1006
    %v1008 = vsub.f32 1.0, %v997
    %1010 = vrot.lane.b32.xlu0 %v1007, 96
    %v1011 = vpop.permute.xlu0 %1010
    %v1013 = vmul.f32 %v1008, %v1011
    %v1014 = vrot.slane %v911, 6
    %v1016 = vmul.f32 %v997, %v1014
    %v1017 = vadd.f32 %v1013, %v1016
    %vm1018 = vcmask 1041408
    %v1019 = vsel %vm1018, %v280, %v385
    %v1020 = vsel %vm96, %v1019, %v491
    %vm1021 = vcmask 1045504
    %v1022 = vsel %vm1021, %v1020, %v597
    %v1023 = vsel %vm1018, %v700, %v805
    %v1024 = vsel %vm96, %v1023, %v911
    %v1025 = vsel %vm1021, %v1024, %v1017
    %v1026 = vld [vmem:[#allocation5] sm:$0xff]
    %v1027 = vld [vmem:[#allocation5 + $0x8] sm:$0xff]
    %v1028 = vld [vmem:[#allocation5 + $0x10] sm:$0xff]
    %v1029 = vld [vmem:[#allocation5 + $0x18] sm:$0xff]
    %v1030 = vld [vmem:[#allocation7] sm:$0xff]
    %v1031 = vld [vmem:[#allocation7 + $0x8] sm:$0xff]
    %v1032 = vld [vmem:[#allocation7 + $0x10] sm:$0xff]
    %v1033 = vld [vmem:[#allocation7 + $0x18] sm:$0xff]
    %v1034 = vld [vmem:[%s7] sm:$0x1]
    %v1035 = vld [vmem:[%s8] sm:$0x1]
    %v1037 = vlaneseq
    %v1038 = vshrl.u32 %v1037, 7
    %v1039 = vsub.s32 0, %v1038
    %v1040 = vrot.slane %v1034, %v1039
    %1044 = vrot.lane.b32.xlu0 %v1022, 96
    %v1045 = vpop.permute.xlu0 %1044
    %1046 = vrot.lane.b32.xlu0 %v1025, 96
    %v1047 = vpop.permute.xlu0 %1046
    %v1048 = vsel %vm181, %v1045, 0
    %v1050 = vsel %vm181, %v1047, 0
    %1052 = vmatprep.subr.mxu0 0.0
    %1053 = vmatpush1.msra.mxu0 0.0
    %1054 = vmatprep.subr.mxu0 0.0
    %1055 = vmatpush1.msra.mxu0 0.0
    %1056 = vmatprep.subr.mxu0 0.0
    %1057 = vmatpush1.msra.mxu0 0.0
    %1058 = vmatprep.subr.mxu0 0.0
    %1059 = vmatpush1.msra.mxu0 0.0
    %1060 = vmatprep.subr.mxu0 0.0
    %1061 = vmatpush1.msra.mxu0 0.0
    %1062 = vmatprep.subr.mxu0 0.0
    %1063 = vmatpush1.msra.mxu0 0.0
    %1064 = vmatprep.subr.mxu0 0.0
    %1065 = vmatpush1.msra.mxu0 0.0
    %1066 = vmatprep.subr.mxu0 0.0
    %1067 = vmatpush1.msra.mxu0 0.0
    %1068 = vmatprep.subr.mxu0 0.0
    %1069 = vmatpush1.msra.mxu0 0.0
    %1070 = vmatprep.subr.mxu0 0.0
    %1071 = vmatpush1.msra.mxu0 0.0
    %1072 = vmatprep.subr.mxu0 0.0
    %1073 = vmatpush1.msra.mxu0 0.0
    %1074 = vmatprep.subr.mxu0 0.0
    %1075 = vmatpush1.msra.mxu0 0.0
    %1076 = vmatprep.subr.mxu0 0.0
    %1077 = vmatpush1.msra.mxu0 %v1029
    %1078 = vmatprep.subr.mxu0 0.0
    %1079 = vmatpush1.msra.mxu0 %v1028
    %1080 = vmatprep.subr.mxu0 0.0
    %1081 = vmatpush1.msra.mxu0 %v1027
    %1082 = vmatprep.subr.mxu0 0.0
    %1083 = vmatpush1.msra.mxu0 %v1026
    %1084 = vmatprep.subr.mxu0 0.0
    %1085 = vmatpush2.msra.mxu0 0.0
    %1086 = vmatprep.subr.mxu0 0.0
    %1087 = vmatpush2.msra.mxu0 0.0
    %1088 = vmatprep.subr.mxu0 0.0
    %1089 = vmatpush2.msra.mxu0 0.0
    %1090 = vmatprep.subr.mxu0 0.0
    %1091 = vmatpush2.msra.mxu0 0.0
    %1092 = vmatprep.subr.mxu0 0.0
    %1093 = vmatpush2.msra.mxu0 0.0
    %1094 = vmatprep.subr.mxu0 0.0
    %1095 = vmatpush2.msra.mxu0 0.0
    %1096 = vmatprep.subr.mxu0 0.0
    %1097 = vmatpush2.msra.mxu0 0.0
    %1098 = vmatprep.subr.mxu0 0.0
    %1099 = vmatpush2.msra.mxu0 0.0
    %1100 = vmatprep.subr.mxu0 0.0
    %1101 = vmatpush2.msra.mxu0 0.0
    %1102 = vmatprep.subr.mxu0 0.0
    %1103 = vmatpush2.msra.mxu0 0.0
    %1104 = vmatprep.subr.mxu0 0.0
    %1105 = vmatpush2.msra.mxu0 0.0
    %1106 = vmatprep.subr.mxu0 0.0
    %1107 = vmatpush2.msra.mxu0 0.0
    %1108 = vmatprep.subr.mxu0 0.0
    %1109 = vmatpush2.msra.mxu0 0.0
    %1110 = vmatprep.subr.mxu0 0.0
    %1111 = vmatpush2.msra.mxu0 0.0
    %1112 = vmatprep.subr.mxu0 0.0
    %1113 = vmatpush2.msra.mxu0 0.0
    %1114 = vmatprep.subr.mxu0 0.0
    %1115 = vmatpush2.msra.mxu0 0.0
    %1116 = vmatprep.mubr.f32.mxu0 0.0
    %1117 = vmatmul.mubr.f32.gmra.mxu0 %v1048
    %v1118 = vpop.f32.mrf.mxu0
    %v1119 = vadd.f32 %v1040, %v1118
    %v1120 = vpop.f32.mrf.mxu0
    %1121 = vmatprep.mubr.f32.mxu0 0.0
    %1122 = vmatmul.mubr.f32.gmra.mxu0 %v1050
    %v1123 = vpop.f32.mrf.mxu0
    %v1124 = vadd.f32 %v1040, %v1123
    %v1125 = vpop.f32.mrf.mxu0
    %1126 = vdwg.mxu0
    %v1128 = vlaneseq
    %v1129 = vshrl.u32 %v1128, 7
    %v1130 = vsub.s32 0, %v1129
    %v1131 = vrot.slane %v1035, %v1130
    %1133 = vmatprep.subr.mxu0 0.0
    %1134 = vmatpush1.msra.mxu0 0.0
    %1135 = vmatprep.subr.mxu0 0.0
    %1136 = vmatpush1.msra.mxu0 0.0
    %1137 = vmatprep.subr.mxu0 0.0
    %1138 = vmatpush1.msra.mxu0 0.0
    %1139 = vmatprep.subr.mxu0 0.0
    %1140 = vmatpush1.msra.mxu0 0.0
    %1141 = vmatprep.subr.mxu0 0.0
    %1142 = vmatpush1.msra.mxu0 0.0
    %1143 = vmatprep.subr.mxu0 0.0
    %1144 = vmatpush1.msra.mxu0 0.0
    %1145 = vmatprep.subr.mxu0 0.0
    %1146 = vmatpush1.msra.mxu0 0.0
    %1147 = vmatprep.subr.mxu0 0.0
    %1148 = vmatpush1.msra.mxu0 0.0
    %1149 = vmatprep.subr.mxu0 0.0
    %1150 = vmatpush1.msra.mxu0 0.0
    %1151 = vmatprep.subr.mxu0 0.0
    %1152 = vmatpush1.msra.mxu0 0.0
    %1153 = vmatprep.subr.mxu0 0.0
    %1154 = vmatpush1.msra.mxu0 0.0
    %1155 = vmatprep.subr.mxu0 0.0
    %1156 = vmatpush1.msra.mxu0 0.0
    %1157 = vmatprep.subr.mxu0 0.0
    %1158 = vmatpush1.msra.mxu0 %v1033
    %1159 = vmatprep.subr.mxu0 0.0
    %1160 = vmatpush1.msra.mxu0 %v1032
    %1161 = vmatprep.subr.mxu0 0.0
    %1162 = vmatpush1.msra.mxu0 %v1031
    %1163 = vmatprep.subr.mxu0 0.0
    %1164 = vmatpush1.msra.mxu0 %v1030
    %1165 = vmatprep.subr.mxu0 0.0
    %1166 = vmatpush2.msra.mxu0 0.0
    %1167 = vmatprep.subr.mxu0 0.0
    %1168 = vmatpush2.msra.mxu0 0.0
    %1169 = vmatprep.subr.mxu0 0.0
    %1170 = vmatpush2.msra.mxu0 0.0
    %1171 = vmatprep.subr.mxu0 0.0
    %1172 = vmatpush2.msra.mxu0 0.0
    %1173 = vmatprep.subr.mxu0 0.0
    %1174 = vmatpush2.msra.mxu0 0.0
    %1175 = vmatprep.subr.mxu0 0.0
    %1176 = vmatpush2.msra.mxu0 0.0
    %1177 = vmatprep.subr.mxu0 0.0
    %1178 = vmatpush2.msra.mxu0 0.0
    %1179 = vmatprep.subr.mxu0 0.0
    %1180 = vmatpush2.msra.mxu0 0.0
    %1181 = vmatprep.subr.mxu0 0.0
    %1182 = vmatpush2.msra.mxu0 0.0
    %1183 = vmatprep.subr.mxu0 0.0
    %1184 = vmatpush2.msra.mxu0 0.0
    %1185 = vmatprep.subr.mxu0 0.0
    %1186 = vmatpush2.msra.mxu0 0.0
    %1187 = vmatprep.subr.mxu0 0.0
    %1188 = vmatpush2.msra.mxu0 0.0
    %1189 = vmatprep.subr.mxu0 0.0
    %1190 = vmatpush2.msra.mxu0 0.0
    %1191 = vmatprep.subr.mxu0 0.0
    %1192 = vmatpush2.msra.mxu0 0.0
    %1193 = vmatprep.subr.mxu0 0.0
    %1194 = vmatpush2.msra.mxu0 0.0
    %1195 = vmatprep.subr.mxu0 0.0
    %1196 = vmatpush2.msra.mxu0 0.0
    %1197 = vmatprep.mubr.f32.mxu0 0.0
    %1198 = vmatmul.mubr.f32.gmra.mxu0 %v183
    %v1199 = vpop.f32.mrf.mxu0
    %v1200 = vadd.f32 %v1131, %v1199
    %v1201 = vpop.f32.mrf.mxu0
    %1202 = vdwg.mxu0
    %v1203 = vadd.f32 %v1119, %v1200
    %v1204 = vxor.u32 %v1203, 2147483648
    %v1205 = vmul.f32 %v1204, 1.442695
    %v1206 = vpow.pop %v1205
    %v1207 = vadd.f32 %v1206, 1.0
    %v1208 = vrcp.pop %v1207
    %v1209 = vmul.f32 1.0, %v1208
    %1211 = vrot.lane.b32.xlu0 %v1200, 64
    %v1212 = vpop.permute.xlu0 %1211
    %v1214 = vmul.f32 %v1209, %v1212
    %1216 = vrot.lane.b32.xlu0 %v1214, 64
    %v1217 = vpop.permute.xlu0 %1216
    %v1219 = vadd.f32 %v1119, %v1217
    %v1220 = vtanh.pop %v1219
    %v1221 = vsub.f32 1.0, %v1209
    %1223 = vrot.lane.b32.xlu0 %v1220, 96
    %v1224 = vpop.permute.xlu0 %1223
    %v1226 = vmul.f32 %v1221, %v1224
    %v1227 = vmul.f32 %v1209, 0.0
    %v1228 = vadd.f32 %v1226, %v1227
    %1230 = vrot.lane.b32.xlu0 %v1228, 96
    %v1231 = vpop.permute.xlu0 %1230
    %v1232 = vsel %vm181, %v1231, 0
    %1234 = vmatprep.subr.mxu0 0.0
    %1235 = vmatpush1.msra.mxu0 0.0
    %1236 = vmatprep.subr.mxu0 0.0
    %1237 = vmatpush1.msra.mxu0 0.0
    %1238 = vmatprep.subr.mxu0 0.0
    %1239 = vmatpush1.msra.mxu0 0.0
    %1240 = vmatprep.subr.mxu0 0.0
    %1241 = vmatpush1.msra.mxu0 0.0
    %1242 = vmatprep.subr.mxu0 0.0
    %1243 = vmatpush1.msra.mxu0 0.0
    %1244 = vmatprep.subr.mxu0 0.0
    %1245 = vmatpush1.msra.mxu0 0.0
    %1246 = vmatprep.subr.mxu0 0.0
    %1247 = vmatpush1.msra.mxu0 0.0
    %1248 = vmatprep.subr.mxu0 0.0
    %1249 = vmatpush1.msra.mxu0 0.0
    %1250 = vmatprep.subr.mxu0 0.0
    %1251 = vmatpush1.msra.mxu0 0.0
    %1252 = vmatprep.subr.mxu0 0.0
    %1253 = vmatpush1.msra.mxu0 0.0
    %1254 = vmatprep.subr.mxu0 0.0
    %1255 = vmatpush1.msra.mxu0 0.0
    %1256 = vmatprep.subr.mxu0 0.0
    %1257 = vmatpush1.msra.mxu0 0.0
    %1258 = vmatprep.subr.mxu0 0.0
    %1259 = vmatpush1.msra.mxu0 %v1033
    %1260 = vmatprep.subr.mxu0 0.0
    %1261 = vmatpush1.msra.mxu0 %v1032
    %1262 = vmatprep.subr.mxu0 0.0
    %1263 = vmatpush1.msra.mxu0 %v1031
    %1264 = vmatprep.subr.mxu0 0.0
    %1265 = vmatpush1.msra.mxu0 %v1030
    %1266 = vmatprep.subr.mxu0 0.0
    %1267 = vmatpush2.msra.mxu0 0.0
    %1268 = vmatprep.subr.mxu0 0.0
    %1269 = vmatpush2.msra.mxu0 0.0
    %1270 = vmatprep.subr.mxu0 0.0
    %1271 = vmatpush2.msra.mxu0 0.0
    %1272 = vmatprep.subr.mxu0 0.0
    %1273 = vmatpush2.msra.mxu0 0.0
    %1274 = vmatprep.subr.mxu0 0.0
    %1275 = vmatpush2.msra.mxu0 0.0
    %1276 = vmatprep.subr.mxu0 0.0
    %1277 = vmatpush2.msra.mxu0 0.0
    %1278 = vmatprep.subr.mxu0 0.0
    %1279 = vmatpush2.msra.mxu0 0.0
    %1280 = vmatprep.subr.mxu0 0.0
    %1281 = vmatpush2.msra.mxu0 0.0
    %1282 = vmatprep.subr.mxu0 0.0
    %1283 = vmatpush2.msra.mxu0 0.0
    %1284 = vmatprep.subr.mxu0 0.0
    %1285 = vmatpush2.msra.mxu0 0.0
    %1286 = vmatprep.subr.mxu0 0.0
    %1287 = vmatpush2.msra.mxu0 0.0
    %1288 = vmatprep.subr.mxu0 0.0
    %1289 = vmatpush2.msra.mxu0 0.0
    %1290 = vmatprep.subr.mxu0 0.0
    %1291 = vmatpush2.msra.mxu0 0.0
    %1292 = vmatprep.subr.mxu0 0.0
    %1293 = vmatpush2.msra.mxu0 0.0
    %1294 = vmatprep.subr.mxu0 0.0
    %1295 = vmatpush2.msra.mxu0 0.0
    %1296 = vmatprep.subr.mxu0 0.0
    %1297 = vmatpush2.msra.mxu0 0.0
    %1298 = vmatprep.mubr.f32.mxu0 0.0
    %1299 = vmatmul.mubr.f32.gmra.mxu0 %v1232
    %v1300 = vpop.f32.mrf.mxu0
    %v1301 = vadd.f32 %v1131, %v1300
    %v1302 = vpop.f32.mrf.mxu0
    %1303 = vdwg.mxu0
    %v1305 = vrot.slane %v1301, 6
    %v1307 = vadd.f32 %v1119, %v1305
    %v1308 = vxor.u32 %v1307, 2147483648
    %v1309 = vmul.f32 %v1308, 1.442695
    %v1310 = vpow.pop %v1309
    %v1311 = vadd.f32 %v1310, 1.0
    %v1312 = vrcp.pop %v1311
    %v1313 = vmul.f32 1.0, %v1312
    %1314 = vrot.lane.b32.xlu0 %v1305, 64
    %v1315 = vpop.permute.xlu0 %1314
    %v1317 = vmul.f32 %v1313, %v1315
    %1319 = vrot.lane.b32.xlu0 %v1317, 64
    %v1320 = vpop.permute.xlu0 %1319
    %v1322 = vadd.f32 %v1119, %v1320
    %v1323 = vtanh.pop %v1322
    %v1324 = vsub.f32 1.0, %v1313
    %1326 = vrot.lane.b32.xlu0 %v1323, 96
    %v1327 = vpop.permute.xlu0 %1326
    %v1329 = vmul.f32 %v1324, %v1327
    %v1330 = vrot.slane %v1228, 6
    %v1332 = vmul.f32 %v1313, %v1330
    %v1333 = vadd.f32 %v1329, %v1332
    %v1335 = vrot.slane %v1333, 2
    %1336 = vrot.lane.b32.xlu0 %v1335, 96
    %v1337 = vpop.permute.xlu0 %1336
    %v1338 = vsel %vm181, %v1337, 0
    %1340 = vmatprep.subr.mxu0 0.0
    %1341 = vmatpush1.msra.mxu0 0.0
    %1342 = vmatprep.subr.mxu0 0.0
    %1343 = vmatpush1.msra.mxu0 0.0
    %1344 = vmatprep.subr.mxu0 0.0
    %1345 = vmatpush1.msra.mxu0 0.0
    %1346 = vmatprep.subr.mxu0 0.0
    %1347 = vmatpush1.msra.mxu0 0.0
    %1348 = vmatprep.subr.mxu0 0.0
    %1349 = vmatpush1.msra.mxu0 0.0
    %1350 = vmatprep.subr.mxu0 0.0
    %1351 = vmatpush1.msra.mxu0 0.0
    %1352 = vmatprep.subr.mxu0 0.0
    %1353 = vmatpush1.msra.mxu0 0.0
    %1354 = vmatprep.subr.mxu0 0.0
    %1355 = vmatpush1.msra.mxu0 0.0
    %1356 = vmatprep.subr.mxu0 0.0
    %1357 = vmatpush1.msra.mxu0 0.0
    %1358 = vmatprep.subr.mxu0 0.0
    %1359 = vmatpush1.msra.mxu0 0.0
    %1360 = vmatprep.subr.mxu0 0.0
    %1361 = vmatpush1.msra.mxu0 0.0
    %1362 = vmatprep.subr.mxu0 0.0
    %1363 = vmatpush1.msra.mxu0 0.0
    %1364 = vmatprep.subr.mxu0 0.0
    %1365 = vmatpush1.msra.mxu0 %v1033
    %1366 = vmatprep.subr.mxu0 0.0
    %1367 = vmatpush1.msra.mxu0 %v1032
    %1368 = vmatprep.subr.mxu0 0.0
    %1369 = vmatpush1.msra.mxu0 %v1031
    %1370 = vmatprep.subr.mxu0 0.0
    %1371 = vmatpush1.msra.mxu0 %v1030
    %1372 = vmatprep.subr.mxu0 0.0
    %1373 = vmatpush2.msra.mxu0 0.0
    %1374 = vmatprep.subr.mxu0 0.0
    %1375 = vmatpush2.msra.mxu0 0.0
    %1376 = vmatprep.subr.mxu0 0.0
    %1377 = vmatpush2.msra.mxu0 0.0
    %1378 = vmatprep.subr.mxu0 0.0
    %1379 = vmatpush2.msra.mxu0 0.0
    %1380 = vmatprep.subr.mxu0 0.0
    %1381 = vmatpush2.msra.mxu0 0.0
    %1382 = vmatprep.subr.mxu0 0.0
    %1383 = vmatpush2.msra.mxu0 0.0
    %1384 = vmatprep.subr.mxu0 0.0
    %1385 = vmatpush2.msra.mxu0 0.0
    %1386 = vmatprep.subr.mxu0 0.0
    %1387 = vmatpush2.msra.mxu0 0.0
    %1388 = vmatprep.subr.mxu0 0.0
    %1389 = vmatpush2.msra.mxu0 0.0
    %1390 = vmatprep.subr.mxu0 0.0
    %1391 = vmatpush2.msra.mxu0 0.0
    %1392 = vmatprep.subr.mxu0 0.0
    %1393 = vmatpush2.msra.mxu0 0.0
    %1394 = vmatprep.subr.mxu0 0.0
    %1395 = vmatpush2.msra.mxu0 0.0
    %1396 = vmatprep.subr.mxu0 0.0
    %1397 = vmatpush2.msra.mxu0 0.0
    %1398 = vmatprep.subr.mxu0 0.0
    %1399 = vmatpush2.msra.mxu0 0.0
    %1400 = vmatprep.subr.mxu0 0.0
    %1401 = vmatpush2.msra.mxu0 0.0
    %1402 = vmatprep.subr.mxu0 0.0
    %1403 = vmatpush2.msra.mxu0 0.0
    %1404 = vmatprep.mubr.f32.mxu0 0.0
    %1405 = vmatmul.mubr.f32.gmra.mxu0 %v1338
    %v1406 = vpop.f32.mrf.mxu0
    %v1407 = vadd.f32 %v1131, %v1406
    %v1408 = vpop.f32.mrf.mxu0
    %1409 = vdwg.mxu0
    %v1411 = vrot.slane %v1407, 4
    %v1413 = vadd.f32 %v1119, %v1411
    %v1414 = vxor.u32 %v1413, 2147483648
    %v1415 = vmul.f32 %v1414, 1.442695
    %v1416 = vpow.pop %v1415
    %v1417 = vadd.f32 %v1416, 1.0
    %v1418 = vrcp.pop %v1417
    %v1419 = vmul.f32 1.0, %v1418
    %1420 = vrot.lane.b32.xlu0 %v1411, 64
    %v1421 = vpop.permute.xlu0 %1420
    %v1423 = vmul.f32 %v1419, %v1421
    %1425 = vrot.lane.b32.xlu0 %v1423, 64
    %v1426 = vpop.permute.xlu0 %1425
    %v1428 = vadd.f32 %v1119, %v1426
    %v1429 = vtanh.pop %v1428
    %v1430 = vsub.f32 1.0, %v1419
    %1432 = vrot.lane.b32.xlu0 %v1429, 96
    %v1433 = vpop.permute.xlu0 %1432
    %v1435 = vmul.f32 %v1430, %v1433
    %v1436 = vrot.slane %v1333, 6
    %v1438 = vmul.f32 %v1419, %v1436
    %v1439 = vadd.f32 %v1435, %v1438
    %v1441 = vrot.slane %v1439, 4
    %1442 = vrot.lane.b32.xlu0 %v1441, 96
    %v1443 = vpop.permute.xlu0 %1442
    %v1444 = vsel %vm181, %v1443, 0
    %1446 = vmatprep.subr.mxu0 0.0
    %1447 = vmatpush1.msra.mxu0 0.0
    %1448 = vmatprep.subr.mxu0 0.0
    %1449 = vmatpush1.msra.mxu0 0.0
    %1450 = vmatprep.subr.mxu0 0.0
    %1451 = vmatpush1.msra.mxu0 0.0
    %1452 = vmatprep.subr.mxu0 0.0
    %1453 = vmatpush1.msra.mxu0 0.0
    %1454 = vmatprep.subr.mxu0 0.0
    %1455 = vmatpush1.msra.mxu0 0.0
    %1456 = vmatprep.subr.mxu0 0.0
    %1457 = vmatpush1.msra.mxu0 0.0
    %1458 = vmatprep.subr.mxu0 0.0
    %1459 = vmatpush1.msra.mxu0 0.0
    %1460 = vmatprep.subr.mxu0 0.0
    %1461 = vmatpush1.msra.mxu0 0.0
    %1462 = vmatprep.subr.mxu0 0.0
    %1463 = vmatpush1.msra.mxu0 0.0
    %1464 = vmatprep.subr.mxu0 0.0
    %1465 = vmatpush1.msra.mxu0 0.0
    %1466 = vmatprep.subr.mxu0 0.0
    %1467 = vmatpush1.msra.mxu0 0.0
    %1468 = vmatprep.subr.mxu0 0.0
    %1469 = vmatpush1.msra.mxu0 0.0
    %1470 = vmatprep.subr.mxu0 0.0
    %1471 = vmatpush1.msra.mxu0 %v1033
    %1472 = vmatprep.subr.mxu0 0.0
    %1473 = vmatpush1.msra.mxu0 %v1032
    %1474 = vmatprep.subr.mxu0 0.0
    %1475 = vmatpush1.msra.mxu0 %v1031
    %1476 = vmatprep.subr.mxu0 0.0
    %1477 = vmatpush1.msra.mxu0 %v1030
    %1478 = vmatprep.subr.mxu0 0.0
    %1479 = vmatpush2.msra.mxu0 0.0
    %1480 = vmatprep.subr.mxu0 0.0
    %1481 = vmatpush2.msra.mxu0 0.0
    %1482 = vmatprep.subr.mxu0 0.0
    %1483 = vmatpush2.msra.mxu0 0.0
    %1484 = vmatprep.subr.mxu0 0.0
    %1485 = vmatpush2.msra.mxu0 0.0
    %1486 = vmatprep.subr.mxu0 0.0
    %1487 = vmatpush2.msra.mxu0 0.0
    %1488 = vmatprep.subr.mxu0 0.0
    %1489 = vmatpush2.msra.mxu0 0.0
    %1490 = vmatprep.subr.mxu0 0.0
    %1491 = vmatpush2.msra.mxu0 0.0
    %1492 = vmatprep.subr.mxu0 0.0
    %1493 = vmatpush2.msra.mxu0 0.0
    %1494 = vmatprep.subr.mxu0 0.0
    %1495 = vmatpush2.msra.mxu0 0.0
    %1496 = vmatprep.subr.mxu0 0.0
    %1497 = vmatpush2.msra.mxu0 0.0
    %1498 = vmatprep.subr.mxu0 0.0
    %1499 = vmatpush2.msra.mxu0 0.0
    %1500 = vmatprep.subr.mxu0 0.0
    %1501 = vmatpush2.msra.mxu0 0.0
    %1502 = vmatprep.subr.mxu0 0.0
    %1503 = vmatpush2.msra.mxu0 0.0
    %1504 = vmatprep.subr.mxu0 0.0
    %1505 = vmatpush2.msra.mxu0 0.0
    %1506 = vmatprep.subr.mxu0 0.0
    %1507 = vmatpush2.msra.mxu0 0.0
    %1508 = vmatprep.subr.mxu0 0.0
    %1509 = vmatpush2.msra.mxu0 0.0
    %1510 = vmatprep.mubr.f32.mxu0 0.0
    %1511 = vmatmul.mubr.f32.gmra.mxu0 %v1444
    %v1512 = vpop.f32.mrf.mxu0
    %v1513 = vadd.f32 %v1131, %v1512
    %v1514 = vpop.f32.mrf.mxu0
    %1515 = vdwg.mxu0
    %v1517 = vrot.slane %v1513, 2
    %v1519 = vadd.f32 %v1119, %v1517
    %v1520 = vxor.u32 %v1519, 2147483648
    %v1521 = vmul.f32 %v1520, 1.442695
    %v1522 = vpow.pop %v1521
    %v1523 = vadd.f32 %v1522, 1.0
    %v1524 = vrcp.pop %v1523
    %v1525 = vmul.f32 1.0, %v1524
    %1526 = vrot.lane.b32.xlu0 %v1517, 64
    %v1527 = vpop.permute.xlu0 %1526
    %v1529 = vmul.f32 %v1525, %v1527
    %1531 = vrot.lane.b32.xlu0 %v1529, 64
    %v1532 = vpop.permute.xlu0 %1531
    %v1534 = vadd.f32 %v1119, %v1532
    %v1535 = vtanh.pop %v1534
    %v1536 = vsub.f32 1.0, %v1525
    %1538 = vrot.lane.b32.xlu0 %v1535, 96
    %v1539 = vpop.permute.xlu0 %1538
    %v1541 = vmul.f32 %v1536, %v1539
    %v1542 = vrot.slane %v1439, 6
    %v1544 = vmul.f32 %v1525, %v1542
    %v1545 = vadd.f32 %v1541, %v1544
    %v1547 = vrot.slane %v1545, 6
    %1548 = vrot.lane.b32.xlu0 %v1547, 96
    %v1549 = vpop.permute.xlu0 %1548
    %v1550 = vsel %vm181, %v1549, 0
    %1552 = vmatprep.subr.mxu0 0.0
    %1553 = vmatpush1.msra.mxu0 0.0
    %1554 = vmatprep.subr.mxu0 0.0
    %1555 = vmatpush1.msra.mxu0 0.0
    %1556 = vmatprep.subr.mxu0 0.0
    %1557 = vmatpush1.msra.mxu0 0.0
    %1558 = vmatprep.subr.mxu0 0.0
    %1559 = vmatpush1.msra.mxu0 0.0
    %1560 = vmatprep.subr.mxu0 0.0
    %1561 = vmatpush1.msra.mxu0 0.0
    %1562 = vmatprep.subr.mxu0 0.0
    %1563 = vmatpush1.msra.mxu0 0.0
    %1564 = vmatprep.subr.mxu0 0.0
    %1565 = vmatpush1.msra.mxu0 0.0
    %1566 = vmatprep.subr.mxu0 0.0
    %1567 = vmatpush1.msra.mxu0 0.0
    %1568 = vmatprep.subr.mxu0 0.0
    %1569 = vmatpush1.msra.mxu0 0.0
    %1570 = vmatprep.subr.mxu0 0.0
    %1571 = vmatpush1.msra.mxu0 0.0
    %1572 = vmatprep.subr.mxu0 0.0
    %1573 = vmatpush1.msra.mxu0 0.0
    %1574 = vmatprep.subr.mxu0 0.0
    %1575 = vmatpush1.msra.mxu0 0.0
    %1576 = vmatprep.subr.mxu0 0.0
    %1577 = vmatpush1.msra.mxu0 %v1033
    %1578 = vmatprep.subr.mxu0 0.0
    %1579 = vmatpush1.msra.mxu0 %v1032
    %1580 = vmatprep.subr.mxu0 0.0
    %1581 = vmatpush1.msra.mxu0 %v1031
    %1582 = vmatprep.subr.mxu0 0.0
    %1583 = vmatpush1.msra.mxu0 %v1030
    %1584 = vmatprep.subr.mxu0 0.0
    %1585 = vmatpush2.msra.mxu0 0.0
    %1586 = vmatprep.subr.mxu0 0.0
    %1587 = vmatpush2.msra.mxu0 0.0
    %1588 = vmatprep.subr.mxu0 0.0
    %1589 = vmatpush2.msra.mxu0 0.0
    %1590 = vmatprep.subr.mxu0 0.0
    %1591 = vmatpush2.msra.mxu0 0.0
    %1592 = vmatprep.subr.mxu0 0.0
    %1593 = vmatpush2.msra.mxu0 0.0
    %1594 = vmatprep.subr.mxu0 0.0
    %1595 = vmatpush2.msra.mxu0 0.0
    %1596 = vmatprep.subr.mxu0 0.0
    %1597 = vmatpush2.msra.mxu0 0.0
    %1598 = vmatprep.subr.mxu0 0.0
    %1599 = vmatpush2.msra.mxu0 0.0
    %1600 = vmatprep.subr.mxu0 0.0
    %1601 = vmatpush2.msra.mxu0 0.0
    %1602 = vmatprep.subr.mxu0 0.0
    %1603 = vmatpush2.msra.mxu0 0.0
    %1604 = vmatprep.subr.mxu0 0.0
    %1605 = vmatpush2.msra.mxu0 0.0
    %1606 = vmatprep.subr.mxu0 0.0
    %1607 = vmatpush2.msra.mxu0 0.0
    %1608 = vmatprep.subr.mxu0 0.0
    %1609 = vmatpush2.msra.mxu0 0.0
    %1610 = vmatprep.subr.mxu0 0.0
    %1611 = vmatpush2.msra.mxu0 0.0
    %1612 = vmatprep.subr.mxu0 0.0
    %1613 = vmatpush2.msra.mxu0 0.0
    %1614 = vmatprep.subr.mxu0 0.0
    %1615 = vmatpush2.msra.mxu0 0.0
    %1616 = vmatprep.mubr.f32.mxu0 0.0
    %1617 = vmatmul.mubr.f32.gmra.mxu0 %v1550
    %v1618 = vpop.f32.mrf.mxu0
    %v1619 = vadd.f32 %v1131, %v1618
    %v1620 = vpop.f32.mrf.mxu0
    %1621 = vdwg.mxu0
    %v1622 = vadd.f32 %v1124, %v1619
    %v1623 = vxor.u32 %v1622, 2147483648
    %v1624 = vmul.f32 %v1623, 1.442695
    %v1625 = vpow.pop %v1624
    %v1626 = vadd.f32 %v1625, 1.0
    %v1627 = vrcp.pop %v1626
    %v1628 = vmul.f32 1.0, %v1627
    %1630 = vrot.lane.b32.xlu0 %v1619, 64
    %v1631 = vpop.permute.xlu0 %1630
    %v1633 = vmul.f32 %v1628, %v1631
    %1635 = vrot.lane.b32.xlu0 %v1633, 64
    %v1636 = vpop.permute.xlu0 %1635
    %v1638 = vadd.f32 %v1124, %v1636
    %v1639 = vtanh.pop %v1638
    %v1640 = vsub.f32 1.0, %v1628
    %1642 = vrot.lane.b32.xlu0 %v1639, 96
    %v1643 = vpop.permute.xlu0 %1642
    %v1645 = vmul.f32 %v1640, %v1643
    %v1647 = vmul.f32 %v1628, %v1547
    %v1648 = vadd.f32 %v1645, %v1647
    %1650 = vrot.lane.b32.xlu0 %v1648, 96
    %v1651 = vpop.permute.xlu0 %1650
    %v1652 = vsel %vm181, %v1651, 0
    %1654 = vmatprep.subr.mxu0 0.0
    %1655 = vmatpush1.msra.mxu0 0.0
    %1656 = vmatprep.subr.mxu0 0.0
    %1657 = vmatpush1.msra.mxu0 0.0
    %1658 = vmatprep.subr.mxu0 0.0
    %1659 = vmatpush1.msra.mxu0 0.0
    %1660 = vmatprep.subr.mxu0 0.0
    %1661 = vmatpush1.msra.mxu0 0.0
    %1662 = vmatprep.subr.mxu0 0.0
    %1663 = vmatpush1.msra.mxu0 0.0
    %1664 = vmatprep.subr.mxu0 0.0
    %1665 = vmatpush1.msra.mxu0 0.0
    %1666 = vmatprep.subr.mxu0 0.0
    %1667 = vmatpush1.msra.mxu0 0.0
    %1668 = vmatprep.subr.mxu0 0.0
    %1669 = vmatpush1.msra.mxu0 0.0
    %1670 = vmatprep.subr.mxu0 0.0
    %1671 = vmatpush1.msra.mxu0 0.0
    %1672 = vmatprep.subr.mxu0 0.0
    %1673 = vmatpush1.msra.mxu0 0.0
    %1674 = vmatprep.subr.mxu0 0.0
    %1675 = vmatpush1.msra.mxu0 0.0
    %1676 = vmatprep.subr.mxu0 0.0
    %1677 = vmatpush1.msra.mxu0 0.0
    %1678 = vmatprep.subr.mxu0 0.0
    %1679 = vmatpush1.msra.mxu0 %v1033
    %1680 = vmatprep.subr.mxu0 0.0
    %1681 = vmatpush1.msra.mxu0 %v1032
    %1682 = vmatprep.subr.mxu0 0.0
    %1683 = vmatpush1.msra.mxu0 %v1031
    %1684 = vmatprep.subr.mxu0 0.0
    %1685 = vmatpush1.msra.mxu0 %v1030
    %1686 = vmatprep.subr.mxu0 0.0
    %1687 = vmatpush2.msra.mxu0 0.0
    %1688 = vmatprep.subr.mxu0 0.0
    %1689 = vmatpush2.msra.mxu0 0.0
    %1690 = vmatprep.subr.mxu0 0.0
    %1691 = vmatpush2.msra.mxu0 0.0
    %1692 = vmatprep.subr.mxu0 0.0
    %1693 = vmatpush2.msra.mxu0 0.0
    %1694 = vmatprep.subr.mxu0 0.0
    %1695 = vmatpush2.msra.mxu0 0.0
    %1696 = vmatprep.subr.mxu0 0.0
    %1697 = vmatpush2.msra.mxu0 0.0
    %1698 = vmatprep.subr.mxu0 0.0
    %1699 = vmatpush2.msra.mxu0 0.0
    %1700 = vmatprep.subr.mxu0 0.0
    %1701 = vmatpush2.msra.mxu0 0.0
    %1702 = vmatprep.subr.mxu0 0.0
    %1703 = vmatpush2.msra.mxu0 0.0
    %1704 = vmatprep.subr.mxu0 0.0
    %1705 = vmatpush2.msra.mxu0 0.0
    %1706 = vmatprep.subr.mxu0 0.0
    %1707 = vmatpush2.msra.mxu0 0.0
    %1708 = vmatprep.subr.mxu0 0.0
    %1709 = vmatpush2.msra.mxu0 0.0
    %1710 = vmatprep.subr.mxu0 0.0
    %1711 = vmatpush2.msra.mxu0 0.0
    %1712 = vmatprep.subr.mxu0 0.0
    %1713 = vmatpush2.msra.mxu0 0.0
    %1714 = vmatprep.subr.mxu0 0.0
    %1715 = vmatpush2.msra.mxu0 0.0
    %1716 = vmatprep.subr.mxu0 0.0
    %1717 = vmatpush2.msra.mxu0 0.0
    %1718 = vmatprep.mubr.f32.mxu0 0.0
    %1719 = vmatmul.mubr.f32.gmra.mxu0 %v1652
    %v1720 = vpop.f32.mrf.mxu0
    %v1721 = vadd.f32 %v1131, %v1720
    %v1722 = vpop.f32.mrf.mxu0
    %1723 = vdwg.mxu0
    %v1725 = vrot.slane %v1721, 6
    %v1727 = vadd.f32 %v1124, %v1725
    %v1728 = vxor.u32 %v1727, 2147483648
    %v1729 = vmul.f32 %v1728, 1.442695
    %v1730 = vpow.pop %v1729
    %v1731 = vadd.f32 %v1730, 1.0
    %v1732 = vrcp.pop %v1731
    %v1733 = vmul.f32 1.0, %v1732
    %1734 = vrot.lane.b32.xlu0 %v1725, 64
    %v1735 = vpop.permute.xlu0 %1734
    %v1737 = vmul.f32 %v1733, %v1735
    %1739 = vrot.lane.b32.xlu0 %v1737, 64
    %v1740 = vpop.permute.xlu0 %1739
    %v1742 = vadd.f32 %v1124, %v1740
    %v1743 = vtanh.pop %v1742
    %v1744 = vsub.f32 1.0, %v1733
    %1746 = vrot.lane.b32.xlu0 %v1743, 96
    %v1747 = vpop.permute.xlu0 %1746
    %v1749 = vmul.f32 %v1744, %v1747
    %v1750 = vrot.slane %v1648, 6
    %v1752 = vmul.f32 %v1733, %v1750
    %v1753 = vadd.f32 %v1749, %v1752
    %v1755 = vrot.slane %v1753, 2
    %1756 = vrot.lane.b32.xlu0 %v1755, 96
    %v1757 = vpop.permute.xlu0 %1756
    %v1758 = vsel %vm181, %v1757, 0
    %1760 = vmatprep.subr.mxu0 0.0
    %1761 = vmatpush1.msra.mxu0 0.0
    %1762 = vmatprep.subr.mxu0 0.0
    %1763 = vmatpush1.msra.mxu0 0.0
    %1764 = vmatprep.subr.mxu0 0.0
    %1765 = vmatpush1.msra.mxu0 0.0
    %1766 = vmatprep.subr.mxu0 0.0
    %1767 = vmatpush1.msra.mxu0 0.0
    %1768 = vmatprep.subr.mxu0 0.0
    %1769 = vmatpush1.msra.mxu0 0.0
    %1770 = vmatprep.subr.mxu0 0.0
    %1771 = vmatpush1.msra.mxu0 0.0
    %1772 = vmatprep.subr.mxu0 0.0
    %1773 = vmatpush1.msra.mxu0 0.0
    %1774 = vmatprep.subr.mxu0 0.0
    %1775 = vmatpush1.msra.mxu0 0.0
    %1776 = vmatprep.subr.mxu0 0.0
    %1777 = vmatpush1.msra.mxu0 0.0
    %1778 = vmatprep.subr.mxu0 0.0
    %1779 = vmatpush1.msra.mxu0 0.0
    %1780 = vmatprep.subr.mxu0 0.0
    %1781 = vmatpush1.msra.mxu0 0.0
    %1782 = vmatprep.subr.mxu0 0.0
    %1783 = vmatpush1.msra.mxu0 0.0
    %1784 = vmatprep.subr.mxu0 0.0
    %1785 = vmatpush1.msra.mxu0 %v1033
    %1786 = vmatprep.subr.mxu0 0.0
    %1787 = vmatpush1.msra.mxu0 %v1032
    %1788 = vmatprep.subr.mxu0 0.0
    %1789 = vmatpush1.msra.mxu0 %v1031
    %1790 = vmatprep.subr.mxu0 0.0
    %1791 = vmatpush1.msra.mxu0 %v1030
    %1792 = vmatprep.subr.mxu0 0.0
    %1793 = vmatpush2.msra.mxu0 0.0
    %1794 = vmatprep.subr.mxu0 0.0
    %1795 = vmatpush2.msra.mxu0 0.0
    %1796 = vmatprep.subr.mxu0 0.0
    %1797 = vmatpush2.msra.mxu0 0.0
    %1798 = vmatprep.subr.mxu0 0.0
    %1799 = vmatpush2.msra.mxu0 0.0
    %1800 = vmatprep.subr.mxu0 0.0
    %1801 = vmatpush2.msra.mxu0 0.0
    %1802 = vmatprep.subr.mxu0 0.0
    %1803 = vmatpush2.msra.mxu0 0.0
    %1804 = vmatprep.subr.mxu0 0.0
    %1805 = vmatpush2.msra.mxu0 0.0
    %1806 = vmatprep.subr.mxu0 0.0
    %1807 = vmatpush2.msra.mxu0 0.0
    %1808 = vmatprep.subr.mxu0 0.0
    %1809 = vmatpush2.msra.mxu0 0.0
    %1810 = vmatprep.subr.mxu0 0.0
    %1811 = vmatpush2.msra.mxu0 0.0
    %1812 = vmatprep.subr.mxu0 0.0
    %1813 = vmatpush2.msra.mxu0 0.0
    %1814 = vmatprep.subr.mxu0 0.0
    %1815 = vmatpush2.msra.mxu0 0.0
    %1816 = vmatprep.subr.mxu0 0.0
    %1817 = vmatpush2.msra.mxu0 0.0
    %1818 = vmatprep.subr.mxu0 0.0
    %1819 = vmatpush2.msra.mxu0 0.0
    %1820 = vmatprep.subr.mxu0 0.0
    %1821 = vmatpush2.msra.mxu0 0.0
    %1822 = vmatprep.subr.mxu0 0.0
    %1823 = vmatpush2.msra.mxu0 0.0
    %1824 = vmatprep.mubr.f32.mxu0 0.0
    %1825 = vmatmul.mubr.f32.gmra.mxu0 %v1758
    %v1826 = vpop.f32.mrf.mxu0
    %v1827 = vadd.f32 %v1131, %v1826
    %v1828 = vpop.f32.mrf.mxu0
    %1829 = vdwg.mxu0
    %v1831 = vrot.slane %v1827, 4
    %v1833 = vadd.f32 %v1124, %v1831
    %v1834 = vxor.u32 %v1833, 2147483648
    %v1835 = vmul.f32 %v1834, 1.442695
    %v1836 = vpow.pop %v1835
    %v1837 = vadd.f32 %v1836, 1.0
    %v1838 = vrcp.pop %v1837
    %v1839 = vmul.f32 1.0, %v1838
    %1840 = vrot.lane.b32.xlu0 %v1831, 64
    %v1841 = vpop.permute.xlu0 %1840
    %v1843 = vmul.f32 %v1839, %v1841
    %1845 = vrot.lane.b32.xlu0 %v1843, 64
    %v1846 = vpop.permute.xlu0 %1845
    %v1848 = vadd.f32 %v1124, %v1846
    %v1849 = vtanh.pop %v1848
    %v1850 = vsub.f32 1.0, %v1839
    %1852 = vrot.lane.b32.xlu0 %v1849, 96
    %v1853 = vpop.permute.xlu0 %1852
    %v1855 = vmul.f32 %v1850, %v1853
    %v1856 = vrot.slane %v1753, 6
    %v1858 = vmul.f32 %v1839, %v1856
    %v1859 = vadd.f32 %v1855, %v1858
    %v1861 = vrot.slane %v1859, 4
    %1862 = vrot.lane.b32.xlu0 %v1861, 96
    %v1863 = vpop.permute.xlu0 %1862
    %v1864 = vsel %vm181, %v1863, 0
    %1866 = vmatprep.subr.mxu0 0.0
    %1867 = vmatpush1.msra.mxu0 0.0
    %1868 = vmatprep.subr.mxu0 0.0
    %1869 = vmatpush1.msra.mxu0 0.0
    %1870 = vmatprep.subr.mxu0 0.0
    %1871 = vmatpush1.msra.mxu0 0.0
    %1872 = vmatprep.subr.mxu0 0.0
    %1873 = vmatpush1.msra.mxu0 0.0
    %1874 = vmatprep.subr.mxu0 0.0
    %1875 = vmatpush1.msra.mxu0 0.0
    %1876 = vmatprep.subr.mxu0 0.0
    %1877 = vmatpush1.msra.mxu0 0.0
    %1878 = vmatprep.subr.mxu0 0.0
    %1879 = vmatpush1.msra.mxu0 0.0
    %1880 = vmatprep.subr.mxu0 0.0
    %1881 = vmatpush1.msra.mxu0 0.0
    %1882 = vmatprep.subr.mxu0 0.0
    %1883 = vmatpush1.msra.mxu0 0.0
    %1884 = vmatprep.subr.mxu0 0.0
    %1885 = vmatpush1.msra.mxu0 0.0
    %1886 = vmatprep.subr.mxu0 0.0
    %1887 = vmatpush1.msra.mxu0 0.0
    %1888 = vmatprep.subr.mxu0 0.0
    %1889 = vmatpush1.msra.mxu0 0.0
    %1890 = vmatprep.subr.mxu0 0.0
    %1891 = vmatpush1.msra.mxu0 %v1033
    %1892 = vmatprep.subr.mxu0 0.0
    %1893 = vmatpush1.msra.mxu0 %v1032
    %1894 = vmatprep.subr.mxu0 0.0
    %1895 = vmatpush1.msra.mxu0 %v1031
    %1896 = vmatprep.subr.mxu0 0.0
    %1897 = vmatpush1.msra.mxu0 %v1030
    %1898 = vmatprep.subr.mxu0 0.0
    %1899 = vmatpush2.msra.mxu0 0.0
    %1900 = vmatprep.subr.mxu0 0.0
    %1901 = vmatpush2.msra.mxu0 0.0
    %1902 = vmatprep.subr.mxu0 0.0
    %1903 = vmatpush2.msra.mxu0 0.0
    %1904 = vmatprep.subr.mxu0 0.0
    %1905 = vmatpush2.msra.mxu0 0.0
    %1906 = vmatprep.subr.mxu0 0.0
    %1907 = vmatpush2.msra.mxu0 0.0
    %1908 = vmatprep.subr.mxu0 0.0
    %1909 = vmatpush2.msra.mxu0 0.0
    %1910 = vmatprep.subr.mxu0 0.0
    %1911 = vmatpush2.msra.mxu0 0.0
    %1912 = vmatprep.subr.mxu0 0.0
    %1913 = vmatpush2.msra.mxu0 0.0
    %1914 = vmatprep.subr.mxu0 0.0
    %1915 = vmatpush2.msra.mxu0 0.0
    %1916 = vmatprep.subr.mxu0 0.0
    %1917 = vmatpush2.msra.mxu0 0.0
    %1918 = vmatprep.subr.mxu0 0.0
    %1919 = vmatpush2.msra.mxu0 0.0
    %1920 = vmatprep.subr.mxu0 0.0
    %1921 = vmatpush2.msra.mxu0 0.0
    %1922 = vmatprep.subr.mxu0 0.0
    %1923 = vmatpush2.msra.mxu0 0.0
    %1924 = vmatprep.subr.mxu0 0.0
    %1925 = vmatpush2.msra.mxu0 0.0
    %1926 = vmatprep.subr.mxu0 0.0
    %1927 = vmatpush2.msra.mxu0 0.0
    %1928 = vmatprep.subr.mxu0 0.0
    %1929 = vmatpush2.msra.mxu0 0.0
    %1930 = vmatprep.mubr.f32.mxu0 0.0
    %1931 = vmatmul.mubr.f32.gmra.mxu0 %v1864
    %v1932 = vpop.f32.mrf.mxu0
    %v1933 = vadd.f32 %v1131, %v1932
    %v1934 = vpop.f32.mrf.mxu0
    %1935 = vdwg.mxu0
    %v1937 = vrot.slane %v1933, 2
    %v1939 = vadd.f32 %v1124, %v1937
    %v1940 = vxor.u32 %v1939, 2147483648
    %v1941 = vmul.f32 %v1940, 1.442695
    %v1942 = vpow.pop %v1941
    %v1943 = vadd.f32 %v1942, 1.0
    %v1944 = vrcp.pop %v1943
    %v1945 = vmul.f32 1.0, %v1944
    %1946 = vrot.lane.b32.xlu0 %v1937, 64
    %v1947 = vpop.permute.xlu0 %1946
    %v1949 = vmul.f32 %v1945, %v1947
    %1951 = vrot.lane.b32.xlu0 %v1949, 64
    %v1952 = vpop.permute.xlu0 %1951
    %v1954 = vadd.f32 %v1124, %v1952
    %v1955 = vtanh.pop %v1954
    %v1956 = vsub.f32 1.0, %v1945
    %1958 = vrot.lane.b32.xlu0 %v1955, 96
    %v1959 = vpop.permute.xlu0 %1958
    %v1961 = vmul.f32 %v1956, %v1959
    %v1962 = vrot.slane %v1859, 6
    %v1964 = vmul.f32 %v1945, %v1962
    %v1965 = vadd.f32 %v1961, %v1964
    %1968 = vrot.lane.b32.xlu0 %v1441, 32
    %v1969 = vpop.permute.xlu0 %1968
    %1971 = vrot.lane.b32.xlu0 %v1547, 64
    %v1972 = vpop.permute.xlu0 %1971
    %1976 = vrot.lane.b32.xlu0 %v1861, 32
    %v1977 = vpop.permute.xlu0 %1976
    %v1980 = vrot.slane %v1965, 6
    %1981 = vrot.lane.b32.xlu0 %v1980, 64
    %v1982 = vpop.permute.xlu0 %1981
    %v1984 = vsel %vm181, %v1231, %v1335
    %vm1985 = vcmask 523264
    %v1986 = vsel %vm1985, %v1984, %v1969
    %vm1987 = vcmask 785408
    %v1988 = vsel %vm1987, %v1986, %v1972
    %v1989 = vsel %vm181, %v1651, %v1755
    %v1990 = vsel %vm1985, %v1989, %v1977
    %v1991 = vsel %vm1987, %v1990, %v1982
    %v1994 = vcombine.low %v1988, %v1991
    %v1996 = vunpack.c.l.s4 1983009808
    %v1997 = vunpack.c.0.s8 %v1996
    %v1998 = vlaneseq
    %v1999 = vshrl.u32 %v1998, 7
    %v2000 = vsub.s32 %v1997, %v1999
    %v2001 = vrot.slane %v1994, %v2000
    %2003 = vst [vmem:[#allocation8] sm:$0xf] %v2001
    // Predicated region
    $region50: #{tpu_custom_call.1} parent=1 // pred_check
      _
    $region51: #{tpu_custom_call.1} parent=1 // pred_check_branch
      %2005 = sbr.rel (0) target = $region53
    $region52: #{tpu_custom_call.1} parent=1 // pred_region
      %s2007 = ssub.s32 64, 64
      %2008 = vsyncadd [#allocation4], %s2007
      %s2010 = sshll.u32 [#allocation8], 4
      %s2011 = int_to_ptr.vmem [resolvable:$true] %s2010
      %2013 = dma.vmem_to_hbm [thread:$0]  %s2011, 64, %s9, [#allocation4]
    $region53: #{tpu_custom_call.1} parent=1 // pred_fallthru
      _
    // Predicated region
    $region54: #{tpu_custom_call.1} parent=1 // pred_check
      _
    $region55: #{tpu_custom_call.1} parent=1 // pred_check_branch
      %2015 = sbr.rel (0) target = $region57
    $region56: #{tpu_custom_call.1} parent=1 // pred_region
      %2016 = dma.done [#allocation4], 64
    $region57: #{tpu_custom_call.1} parent=1 // pred_fallthru
      _
    %2017 = vsyncpa [#allocation3], 1
    %2018 = vsyncpa [#allocation6], 1
    %2019 = vsyncpa [#allocation4], 1

</llo_original>
